<compile_context>
chip_gen: v7x
topology: tpu7x:2x2x1
jax: 0.10.0
libtpu: 0.0.40
codegen_flags: <defaults>
</compile_context>

<pallas_src>
import jax
import jax.numpy as jnp
from jax.experimental import pallas as pl
from jax.experimental.pallas import tpu as pltpu

Z_DIM = 100
DIMS = [Z_DIM, 128, 256, 512, 1024, 3]          # logical layer widths (PyTorch)
PADDED_DIMS = [128, 128, 256, 512, 1024, 128]   # lane-aligned widths used in-kernel


def _round_up(x, m):
    return (x + m - 1) // m * m


def _generator_kernel(z_ref,
                      w1_ref, b1_ref,
                      w2_ref, b2_ref,
                      w3_ref, b3_ref,
                      w4_ref, b4_ref,
                      w5_ref, b5_ref,
                      out_ref):
    # Matmuls: bf16 x bf16 -> f32 accumulation on the MXU.
    # Elementwise (bias add, ReLU) in f32; cast back to bf16 only to feed the
    # next matmul.
    h = jnp.dot(z_ref[...], w1_ref[...], preferred_element_type=jnp.float32)
    h = jnp.maximum(h + b1_ref[...], 0.0)

    h = jnp.dot(h.astype(jnp.bfloat16), w2_ref[...], preferred_element_type=jnp.float32)
    h = jnp.maximum(h + b2_ref[...], 0.0)

    h = jnp.dot(h.astype(jnp.bfloat16), w3_ref[...], preferred_element_type=jnp.float32)
    h = jnp.maximum(h + b3_ref[...], 0.0)

    h = jnp.dot(h.astype(jnp.bfloat16), w4_ref[...], preferred_element_type=jnp.float32)
    h = jnp.maximum(h + b4_ref[...], 0.0)

    # Final layer: N padded to 128 (zeros beyond column 3) -> lane-dense store.
    h = jnp.dot(h.astype(jnp.bfloat16), w5_ref[...], preferred_element_type=jnp.float32)
    out_ref[...] = (h + b5_ref[...]).astype(out_ref.dtype)


def _pad_params(params):
    """Zero-pad W1's contraction dim (100->128) and layer-5's output dim (3->128).
    Weights -> bf16 (MXU inputs); biases stay f32 (VPU math)."""
    padded = []
    for li, (w, b) in enumerate(params):
        in_pad = PADDED_DIMS[li] - w.shape[0]
        out_pad = PADDED_DIMS[li + 1] - w.shape[1]
        w_p = jnp.pad(w, ((0, in_pad), (0, out_pad))).astype(jnp.bfloat16)
        b_p = jnp.pad(b, ((0, 0), (0, out_pad))).astype(jnp.float32)
        padded.append((w_p, b_p))
    return padded


def generator_forward(z, params, *, tm=256):
    """z: (B, 100) float32; params: list of (W, b) with W (in, out), b (1, out)."""
    B = z.shape[0]
    tm = min(tm, _round_up(B, 8))          # keep tile a multiple of 8 sublanes
    B_pad = _round_up(B, tm)
    grid = (B_pad // tm,)

    # Pad batch + feature dims; activations feed the MXU in bf16.
    z_p = jnp.pad(z, ((0, B_pad - B), (0, PADDED_DIMS[0] - Z_DIM))).astype(jnp.bfloat16)
    padded_params = _pad_params(params)

    flat_params = []
    in_specs = [pl.BlockSpec((tm, PADDED_DIMS[0]), lambda i: (i, 0))]
    for (w, b) in padded_params:
        flat_params.extend([w, b])
        # Constant block index -> Pallas skips re-DMA: weights stay VMEM-resident.
        in_specs.append(pl.BlockSpec(w.shape, lambda i: (0, 0)))
        in_specs.append(pl.BlockSpec(b.shape, lambda i: (0, 0)))
    out_specs = pl.BlockSpec((tm, PADDED_DIMS[-1]), lambda i: (i, 0))

    flops = 2 * B_pad * sum(PADDED_DIMS[i] * PADDED_DIMS[i + 1] for i in range(5))
    weight_bytes = sum(int(w.size) * w.dtype.itemsize + int(b.size) * b.dtype.itemsize
                       for (w, b) in padded_params)
    bytes_accessed = weight_bytes + int(z_p.size) * 2 + B_pad * PADDED_DIMS[-1] * 4

    out_padded = pl.pallas_call(
        _generator_kernel,
        out_shape=jax.ShapeDtypeStruct((B_pad, PADDED_DIMS[-1]), jnp.float32),
        grid=grid,
        in_specs=in_specs,
        out_specs=out_specs,
        compiler_params=pltpu.CompilerParams(
            dimension_semantics=("parallel",),        # shard batch tiles across TCs (v7x)
            vmem_limit_bytes=32 * 1024 * 1024),
        cost_estimate=pl.CostEstimate(
            flops=flops, transcendentals=0, bytes_accessed=bytes_accessed),
    )(z_p, *flat_params)

    return out_padded[:B, :DIMS[-1]]


def init_params(key):
    """Deterministic init mimicking torch.nn.Linear's uniform(-1/sqrt(in), 1/sqrt(in))."""
    params = []
    for i in range(len(DIMS) - 1):
        fan_in, fan_out = DIMS[i], DIMS[i + 1]
        key, kw, kb = jax.random.split(key, 3)
        bound = 1.0 / jnp.sqrt(jnp.float32(fan_in))
        w = jax.random.uniform(kw, (fan_in, fan_out), jnp.float32, -bound, bound)
        b = jax.random.uniform(kb, (1, fan_out), jnp.float32, -bound, bound)
        params.append((w, b))
    return params


def reference_forward(z, params):
    """Pure-JAX reference mirroring the kernel's bf16-input / f32-accumulate path."""
    padded_params = _pad_params(params)
    h = jnp.pad(z, ((0, 0), (0, PADDED_DIMS[0] - Z_DIM))).astype(jnp.bfloat16)
    for i, (w, b) in enumerate(padded_params):
        h = jnp.dot(h, w, preferred_element_type=jnp.float32) + b
        if i < len(padded_params) - 1:
            h = jnp.maximum(h, 0.0).astype(jnp.bfloat16)
    return h[:, :DIMS[-1]]


if __name__ == "__main__":
    key = jax.random.PRNGKey(0)
    key, kz = jax.random.split(key)

    batch = 8
    z = jax.random.normal(kz, (batch, Z_DIM), jnp.float32)
    params = init_params(key)

    out = generator_forward(z, params)
    out = jax.block_until_ready(out)

    ref = reference_forward(z, params)
    assert out.shape == (batch, DIMS[-1]), out.shape
    assert jnp.allclose(out, ref, atol=5e-3, rtol=5e-3), "mismatch vs reference"

    print("KERNEL_OK")
</pallas_src>

<mosaic_0001>
module attributes {stable_mosaic.version = 11 : i64} {
  func.func @_generator_kernel(%arg0: i32, %arg1: memref<8x128xbf16, #tpu.memory_space<vmem>>, %arg2: memref<128x128xbf16, #tpu.memory_space<vmem>>, %arg3: memref<1x128xf32, #tpu.memory_space<vmem>>, %arg4: memref<128x256xbf16, #tpu.memory_space<vmem>>, %arg5: memref<1x256xf32, #tpu.memory_space<vmem>>, %arg6: memref<256x512xbf16, #tpu.memory_space<vmem>>, %arg7: memref<1x512xf32, #tpu.memory_space<vmem>>, %arg8: memref<512x1024xbf16, #tpu.memory_space<vmem>>, %arg9: memref<1x1024xf32, #tpu.memory_space<vmem>>, %arg10: memref<1024x128xbf16, #tpu.memory_space<vmem>>, %arg11: memref<1x128xf32, #tpu.memory_space<vmem>>, %arg12: memref<8x128xf32, #tpu.memory_space<vmem>>) attributes {dimension_semantics = [#tpu.dimension_semantics<parallel>], iteration_bounds = array<i64: 1>, scalar_prefetch = 0 : i64, scratch_operands = 0 : i64, tpu.core_type = #tpu.core_type<tc>, window_params = [{transform_indices = @transform_0, window_bounds = array<i64: 8, 128>}, {pipeline_mode = #tpu.pipeline_mode<synchronous>, transform_indices = @transform_1, window_bounds = array<i64: 128, 128>}, {pipeline_mode = #tpu.pipeline_mode<synchronous>, transform_indices = @transform_2, window_bounds = array<i64: 1, 128>}, {pipeline_mode = #tpu.pipeline_mode<synchronous>, transform_indices = @transform_3, window_bounds = array<i64: 128, 256>}, {pipeline_mode = #tpu.pipeline_mode<synchronous>, transform_indices = @transform_4, window_bounds = array<i64: 1, 256>}, {pipeline_mode = #tpu.pipeline_mode<synchronous>, transform_indices = @transform_5, window_bounds = array<i64: 256, 512>}, {pipeline_mode = #tpu.pipeline_mode<synchronous>, transform_indices = @transform_6, window_bounds = array<i64: 1, 512>}, {pipeline_mode = #tpu.pipeline_mode<synchronous>, transform_indices = @transform_7, window_bounds = array<i64: 512, 1024>}, {pipeline_mode = #tpu.pipeline_mode<synchronous>, transform_indices = @transform_8, window_bounds = array<i64: 1, 1024>}, {pipeline_mode = #tpu.pipeline_mode<synchronous>, transform_indices = @transform_9, window_bounds = array<i64: 1024, 128>}, {pipeline_mode = #tpu.pipeline_mode<synchronous>, transform_indices = @transform_10, window_bounds = array<i64: 1, 128>}, {transform_indices = @transform_11, window_bounds = array<i64: 8, 128>}]} {
    %c0 = arith.constant 0 : index
    %c0_0 = arith.constant 0 : index
    %0 = vector.load %arg1[%c0, %c0_0] : memref<8x128xbf16, #tpu.memory_space<vmem>>, vector<8x128xbf16>
    %c0_1 = arith.constant 0 : index
    %c0_2 = arith.constant 0 : index
    %1 = vector.load %arg2[%c0_1, %c0_2] : memref<128x128xbf16, #tpu.memory_space<vmem>>, vector<128x128xbf16>
    %cst = arith.constant dense<0.000000e+00> : vector<8x128xf32>
    %2 = tpu.matmul %0, %1, %cst {dimension_numbers = #tpu.dot_dimension_numbers<[1], [0], [0], [1], [0, 0, 1, 1], [], []>} : vector<8x128xbf16>, vector<128x128xbf16>, vector<8x128xf32> -> vector<8x128xf32>
    %c0_3 = arith.constant 0 : index
    %c0_4 = arith.constant 0 : index
    %3 = vector.load %arg3[%c0_3, %c0_4] : memref<1x128xf32, #tpu.memory_space<vmem>>, vector<1x128xf32>
    %4 = vector.broadcast %3 : vector<1x128xf32> to vector<8x128xf32>
    %5 = arith.addf %2, %4 : vector<8x128xf32>
    %cst_5 = arith.constant 0.000000e+00 : f32
    %6 = vector.broadcast %cst_5 : f32 to vector<8x128xf32>
    %7 = arith.maximumf %5, %6 : vector<8x128xf32>
    %8 = arith.truncf %7 : vector<8x128xf32> to vector<8x128xbf16>
    %c0_6 = arith.constant 0 : index
    %c0_7 = arith.constant 0 : index
    %9 = vector.load %arg4[%c0_6, %c0_7] : memref<128x256xbf16, #tpu.memory_space<vmem>>, vector<128x256xbf16>
    %cst_8 = arith.constant dense<0.000000e+00> : vector<8x256xf32>
    %10 = tpu.matmul %8, %9, %cst_8 {dimension_numbers = #tpu.dot_dimension_numbers<[1], [0], [0], [1], [0, 0, 1, 1], [], []>} : vector<8x128xbf16>, vector<128x256xbf16>, vector<8x256xf32> -> vector<8x256xf32>
    %c0_9 = arith.constant 0 : index
    %c0_10 = arith.constant 0 : index
    %11 = vector.load %arg5[%c0_9, %c0_10] : memref<1x256xf32, #tpu.memory_space<vmem>>, vector<1x256xf32>
    %12 = vector.broadcast %11 : vector<1x256xf32> to vector<8x256xf32>
    %13 = arith.addf %10, %12 : vector<8x256xf32>
    %cst_11 = arith.constant 0.000000e+00 : f32
    %14 = vector.broadcast %cst_11 : f32 to vector<8x256xf32>
    %15 = arith.maximumf %13, %14 : vector<8x256xf32>
    %16 = arith.truncf %15 : vector<8x256xf32> to vector<8x256xbf16>
    %c0_12 = arith.constant 0 : index
    %c0_13 = arith.constant 0 : index
    %17 = vector.load %arg6[%c0_12, %c0_13] : memref<256x512xbf16, #tpu.memory_space<vmem>>, vector<256x512xbf16>
    %cst_14 = arith.constant dense<0.000000e+00> : vector<8x512xf32>
    %18 = tpu.matmul %16, %17, %cst_14 {dimension_numbers = #tpu.dot_dimension_numbers<[1], [0], [0], [1], [0, 0, 1, 1], [], []>} : vector<8x256xbf16>, vector<256x512xbf16>, vector<8x512xf32> -> vector<8x512xf32>
    %c0_15 = arith.constant 0 : index
    %c0_16 = arith.constant 0 : index
    %19 = vector.load %arg7[%c0_15, %c0_16] : memref<1x512xf32, #tpu.memory_space<vmem>>, vector<1x512xf32>
    %20 = vector.broadcast %19 : vector<1x512xf32> to vector<8x512xf32>
    %21 = arith.addf %18, %20 : vector<8x512xf32>
    %cst_17 = arith.constant 0.000000e+00 : f32
    %22 = vector.broadcast %cst_17 : f32 to vector<8x512xf32>
    %23 = arith.maximumf %21, %22 : vector<8x512xf32>
    %24 = arith.truncf %23 : vector<8x512xf32> to vector<8x512xbf16>
    %c0_18 = arith.constant 0 : index
    %c0_19 = arith.constant 0 : index
    %25 = vector.load %arg8[%c0_18, %c0_19] : memref<512x1024xbf16, #tpu.memory_space<vmem>>, vector<512x1024xbf16>
    %cst_20 = arith.constant dense<0.000000e+00> : vector<8x1024xf32>
    %26 = tpu.matmul %24, %25, %cst_20 {dimension_numbers = #tpu.dot_dimension_numbers<[1], [0], [0], [1], [0, 0, 1, 1], [], []>} : vector<8x512xbf16>, vector<512x1024xbf16>, vector<8x1024xf32> -> vector<8x1024xf32>
    %c0_21 = arith.constant 0 : index
    %c0_22 = arith.constant 0 : index
    %27 = vector.load %arg9[%c0_21, %c0_22] : memref<1x1024xf32, #tpu.memory_space<vmem>>, vector<1x1024xf32>
    %28 = vector.broadcast %27 : vector<1x1024xf32> to vector<8x1024xf32>
    %29 = arith.addf %26, %28 : vector<8x1024xf32>
    %cst_23 = arith.constant 0.000000e+00 : f32
    %30 = vector.broadcast %cst_23 : f32 to vector<8x1024xf32>
    %31 = arith.maximumf %29, %30 : vector<8x1024xf32>
    %32 = arith.truncf %31 : vector<8x1024xf32> to vector<8x1024xbf16>
    %c0_24 = arith.constant 0 : index
    %c0_25 = arith.constant 0 : index
    %33 = vector.load %arg10[%c0_24, %c0_25] : memref<1024x128xbf16, #tpu.memory_space<vmem>>, vector<1024x128xbf16>
    %cst_26 = arith.constant dense<0.000000e+00> : vector<8x128xf32>
    %34 = tpu.matmul %32, %33, %cst_26 {dimension_numbers = #tpu.dot_dimension_numbers<[1], [0], [0], [1], [0, 0, 1, 1], [], []>} : vector<8x1024xbf16>, vector<1024x128xbf16>, vector<8x128xf32> -> vector<8x128xf32>
    %c0_27 = arith.constant 0 : index
    %c0_28 = arith.constant 0 : index
    %35 = vector.load %arg11[%c0_27, %c0_28] : memref<1x128xf32, #tpu.memory_space<vmem>>, vector<1x128xf32>
    %36 = vector.broadcast %35 : vector<1x128xf32> to vector<8x128xf32>
    %37 = arith.addf %34, %36 : vector<8x128xf32>
    %c0_29 = arith.constant 0 : index
    %c0_30 = arith.constant 0 : index
    %38 = vector.load %arg12[%c0_29, %c0_30] : memref<8x128xf32, #tpu.memory_space<vmem>>, vector<8x128xf32>
    tpu.vector_store %arg12[%c0_29, %c0_30], %37 {strides = array<i32>} : memref<8x128xf32, #tpu.memory_space<vmem>>, vector<8x128xf32>,
    return
  }
  func.func @transform_0(%arg0: i32) -> (i32, i32) {
    %c0_i32 = arith.constant 0 : i32
    %c0_i32_0 = arith.constant 0 : i32
    return %arg0, %c0_i32 : i32, i32
  }
  func.func @transform_1(%arg0: i32) -> (i32, i32) {
    %c0_i32 = arith.constant 0 : i32
    %c0_i32_0 = arith.constant 0 : i32
    %c0_i32_1 = arith.constant 0 : i32
    return %c0_i32, %c0_i32_0 : i32, i32
  }
  func.func @transform_2(%arg0: i32) -> (i32, i32) {
    %c0_i32 = arith.constant 0 : i32
    %c0_i32_0 = arith.constant 0 : i32
    %c0_i32_1 = arith.constant 0 : i32
    return %c0_i32, %c0_i32_0 : i32, i32
  }
  func.func @transform_3(%arg0: i32) -> (i32, i32) {
    %c0_i32 = arith.constant 0 : i32
    %c0_i32_0 = arith.constant 0 : i32
    %c0_i32_1 = arith.constant 0 : i32
    return %c0_i32, %c0_i32_0 : i32, i32
  }
  func.func @transform_4(%arg0: i32) -> (i32, i32) {
    %c0_i32 = arith.constant 0 : i32
    %c0_i32_0 = arith.constant 0 : i32
    %c0_i32_1 = arith.constant 0 : i32
    return %c0_i32, %c0_i32_0 : i32, i32
  }
  func.func @transform_5(%arg0: i32) -> (i32, i32) {
    %c0_i32 = arith.constant 0 : i32
    %c0_i32_0 = arith.constant 0 : i32
    %c0_i32_1 = arith.constant 0 : i32
    return %c0_i32, %c0_i32_0 : i32, i32
  }
  func.func @transform_6(%arg0: i32) -> (i32, i32) {
    %c0_i32 = arith.constant 0 : i32
    %c0_i32_0 = arith.constant 0 : i32
    %c0_i32_1 = arith.constant 0 : i32
    return %c0_i32, %c0_i32_0 : i32, i32
  }
  func.func @transform_7(%arg0: i32) -> (i32, i32) {
    %c0_i32 = arith.constant 0 : i32
    %c0_i32_0 = arith.constant 0 : i32
    %c0_i32_1 = arith.constant 0 : i32
    return %c0_i32, %c0_i32_0 : i32, i32
  }
  func.func @transform_8(%arg0: i32) -> (i32, i32) {
    %c0_i32 = arith.constant 0 : i32
    %c0_i32_0 = arith.constant 0 : i32
    %c0_i32_1 = arith.constant 0 : i32
    return %c0_i32, %c0_i32_0 : i32, i32
  }
  func.func @transform_9(%arg0: i32) -> (i32, i32) {
    %c0_i32 = arith.constant 0 : i32
    %c0_i32_0 = arith.constant 0 : i32
    %c0_i32_1 = arith.constant 0 : i32
    return %c0_i32, %c0_i32_0 : i32, i32
  }
  func.func @transform_10(%arg0: i32) -> (i32, i32) {
    %c0_i32 = arith.constant 0 : i32
    %c0_i32_0 = arith.constant 0 : i32
    %c0_i32_1 = arith.constant 0 : i32
    return %c0_i32, %c0_i32_0 : i32, i32
  }
  func.func @transform_11(%arg0: i32) -> (i32, i32) {
    %c0_i32 = arith.constant 0 : i32
    %c0_i32_0 = arith.constant 0 : i32
    return %arg0, %c0_i32 : i32, i32
  }
}

</mosaic_0001>

<llo_original>
// kernel: tpu_custom_call.1
$region0: #{tpu_custom_call.1}
  #allocation0 [shape = 'u32[]', space=smem, size = 0x4, offset = 0x4, fixed_abs, tag = 'smem constant byte address 0x4 - core index']
  #allocation1 [shape = 'u32[144,128]{1,0:T(1,128)}', space=vmem, size = 0x12000, scoped, tag = 'internal scratch']
  %s0 = inlined_call_operand.hbm [shape: bf16[8,128], index: 0, kind: input, shape index: {}]
  %s1 = inlined_call_operand.hbm [shape: bf16[128,128], index: 1, kind: input, shape index: {}]
  %s2 = inlined_call_operand.vmem [shape: f32[1,128], index: 2, kind: input, shape index: {}]
  %s3 = inlined_call_operand.hbm [shape: bf16[128,256], index: 3, kind: input, shape index: {}]
  %s4 = inlined_call_operand.vmem [shape: f32[1,256], index: 4, kind: input, shape index: {}]
  %s5 = inlined_call_operand.hbm [shape: bf16[256,512], index: 5, kind: input, shape index: {}]
  %s6 = inlined_call_operand.vmem [shape: f32[1,512], index: 6, kind: input, shape index: {}]
  %s7 = inlined_call_operand.hbm [shape: bf16[512,1024], index: 7, kind: input, shape index: {}]
  %s8 = inlined_call_operand.vmem [shape: f32[1,1024], index: 8, kind: input, shape index: {}]
  %s9 = inlined_call_operand.hbm [shape: bf16[1024,128], index: 9, kind: input, shape index: {}]
  %s10 = inlined_call_operand.vmem [shape: f32[1,128], index: 10, kind: input, shape index: {}]
  %s11 = inlined_call_operand.hbm [shape: f32[8,128], index: 11, kind: output, shape index: {}]
  %s12 = sld [smem:[#allocation0]]
  $region78: #{tpu_custom_call.1} parent=0
    _
  %s14 = ssub.s32 1, %s12
  %s15 = scalar_select 0, %s14, %s12
  $region1: #{tpu_custom_call.1} parent=0
    #allocation2 [shape = 'u8[2048]{0}', space=vmem, size = 0x800, scoped, tag = 'input window, operand 0, single buffered']
    #allocation3 [shape = 's32[1]{0}', space=sflag, size = 0x4, scoped, tag = 'scoped memory for tpu_custom_call.1']
    #allocation4 [shape = 's32[1]{0}', space=sflag, size = 0x4, scoped, tag = 'scoped memory for tpu_custom_call.1']
    #allocation5 [shape = 'u8[32768]{0}', space=vmem, size = 0x8000, scoped, tag = 'input window, operand 1, single buffered']
    #allocation6 [shape = 's32[1]{0}', space=sflag, size = 0x4, scoped, tag = 'scoped memory for tpu_custom_call.1']
    #allocation7 [shape = 'u8[65536]{0}', space=vmem, size = 0x10000, scoped, tag = 'input window, operand 3, single buffered']
    #allocation8 [shape = 'u8[262144]{0}', space=vmem, size = 0x40000, scoped, tag = 'input window, operand 5, single buffered']
    #allocation9 [shape = 's32[1]{0}', space=sflag, size = 0x4, scoped, tag = 'scoped memory for tpu_custom_call.1']
    #allocation10 [shape = 'u8[1048576]{0}', space=vmem, size = 0x100000, scoped, tag = 'input window, operand 7, single buffered']
    #allocation11 [shape = 'u8[262144]{0}', space=vmem, size = 0x40000, scoped, tag = 'input window, operand 9, single buffered']
    #allocation12 [shape = 's32[1]{0}', space=sflag, size = 0x4, scoped, tag = 'scoped memory for tpu_custom_call.1']
    #allocation13 [shape = 'u8[4096]{0}', space=vmem, size = 0x1000, scoped, tag = 'output window, operand 0, single buffered']
    %16 = vsyncpa [#allocation3], 0
    %17 = vsyncpa [#allocation6], 0
    %18 = vsyncpa [#allocation9], 0
    %19 = vsyncpa [#allocation12], 0
    %20 = vsyncpa [#allocation4], 0
    // Predicated region
    $region2: #{tpu_custom_call.1} parent=1 // pred_check
      _
    $region3: #{tpu_custom_call.1} parent=1 // pred_check_branch
      %22 = sbr.rel (0) target = $region5
    $region4: #{tpu_custom_call.1} parent=1 // pred_region
      %s24 = ssub.s32 64, 64
      %25 = vsyncadd [#allocation3], %s24
      %s27 = sshll.u32 [#allocation2], 4
      %s28 = int_to_ptr.vmem [resolvable:$true] %s27
      %30 = dma.hbm_to_vmem [thread:$0]  %s0, 64, %s28, [#allocation3]
    $region5: #{tpu_custom_call.1} parent=1 // pred_fallthru
      _
    // Predicated region
    $region6: #{tpu_custom_call.1} parent=1 // pred_check
      _
    $region7: #{tpu_custom_call.1} parent=1 // pred_check_branch
      %32 = sbr.rel (0) target = $region9
    $region8: #{tpu_custom_call.1} parent=1 // pred_region
      %s34 = ssub.s32 1024, 1024
      %35 = vsyncadd [#allocation6], %s34
      %s36 = sshll.u32 [#allocation5], 4
      %s37 = int_to_ptr.vmem [resolvable:$true] %s36
      %42 = dma.hbm_to_vmem [thread:$0]  %s1, 1024, %s37, [#allocation6], 64, 64, 4
    $region9: #{tpu_custom_call.1} parent=1 // pred_fallthru
      _
    // Predicated region
    $region10: #{tpu_custom_call.1} parent=1 // pred_check
      _
    $region11: #{tpu_custom_call.1} parent=1 // pred_check_branch
      %44 = sbr.rel (0) target = $region13
    $region12: #{tpu_custom_call.1} parent=1 // pred_region
      _
    $region13: #{tpu_custom_call.1} parent=1 // pred_fallthru
      _
    // Predicated region
    $region14: #{tpu_custom_call.1} parent=1 // pred_check
      _
    $region15: #{tpu_custom_call.1} parent=1 // pred_check_branch
      %46 = sbr.rel (0) target = $region17
    $region16: #{tpu_custom_call.1} parent=1 // pred_region
      %s48 = ssub.s32 2048, 2048
      %49 = vsyncadd [#allocation6], %s48
      %s50 = sshll.u32 [#allocation7], 4
      %s51 = int_to_ptr.vmem [resolvable:$true] %s50
      %56 = dma.hbm_to_vmem [thread:$0]  %s3, 2048, %s51, [#allocation6], 128, 128, 8
    $region17: #{tpu_custom_call.1} parent=1 // pred_fallthru
      _
    // Predicated region
    $region18: #{tpu_custom_call.1} parent=1 // pred_check
      _
    $region19: #{tpu_custom_call.1} parent=1 // pred_check_branch
      %58 = sbr.rel (0) target = $region21
    $region20: #{tpu_custom_call.1} parent=1 // pred_region
      _
    $region21: #{tpu_custom_call.1} parent=1 // pred_fallthru
      _
    // Predicated region
    $region22: #{tpu_custom_call.1} parent=1 // pred_check
      _
    $region23: #{tpu_custom_call.1} parent=1 // pred_check_branch
      %60 = sbr.rel (0) target = $region25
    $region24: #{tpu_custom_call.1} parent=1 // pred_region
      %s62 = ssub.s32 8192, 8192
      %63 = vsyncadd [#allocation9], %s62
      %s64 = sshll.u32 [#allocation8], 4
      %s65 = int_to_ptr.vmem [resolvable:$true] %s64
      %70 = dma.hbm_to_vmem [thread:$0]  %s5, 8192, %s65, [#allocation9], 256, 256, 16
    $region25: #{tpu_custom_call.1} parent=1 // pred_fallthru
      _
    // Predicated region
    $region26: #{tpu_custom_call.1} parent=1 // pred_check
      _
    $region27: #{tpu_custom_call.1} parent=1 // pred_check_branch
      %72 = sbr.rel (0) target = $region29
    $region28: #{tpu_custom_call.1} parent=1 // pred_region
      _
    $region29: #{tpu_custom_call.1} parent=1 // pred_fallthru
      _
    // Predicated region
    $region30: #{tpu_custom_call.1} parent=1 // pred_check
      _
    $region31: #{tpu_custom_call.1} parent=1 // pred_check_branch
      %74 = sbr.rel (0) target = $region33
    $region32: #{tpu_custom_call.1} parent=1 // pred_region
      %s76 = ssub.s32 32768, 32768
      %77 = vsyncadd [#allocation9], %s76
      %s78 = sshll.u32 [#allocation10], 4
      %s79 = int_to_ptr.vmem [resolvable:$true] %s78
      %84 = dma.hbm_to_vmem [thread:$0]  %s7, 32768, %s79, [#allocation9], 512, 512, 32
    $region33: #{tpu_custom_call.1} parent=1 // pred_fallthru
      _
    // Predicated region
    $region34: #{tpu_custom_call.1} parent=1 // pred_check
      _
    $region35: #{tpu_custom_call.1} parent=1 // pred_check_branch
      %86 = sbr.rel (0) target = $region37
    $region36: #{tpu_custom_call.1} parent=1 // pred_region
      _
    $region37: #{tpu_custom_call.1} parent=1 // pred_fallthru
      _
    // Predicated region
    $region38: #{tpu_custom_call.1} parent=1 // pred_check
      _
    $region39: #{tpu_custom_call.1} parent=1 // pred_check_branch
      %88 = sbr.rel (0) target = $region41
    $region40: #{tpu_custom_call.1} parent=1 // pred_region
      %s90 = ssub.s32 8192, 8192
      %91 = vsyncadd [#allocation12], %s90
      %s92 = sshll.u32 [#allocation11], 4
      %s93 = int_to_ptr.vmem [resolvable:$true] %s92
      %98 = dma.hbm_to_vmem [thread:$0]  %s9, 8192, %s93, [#allocation12], 64, 64, 4
    $region41: #{tpu_custom_call.1} parent=1 // pred_fallthru
      _
    // Predicated region
    $region42: #{tpu_custom_call.1} parent=1 // pred_check
      _
    $region43: #{tpu_custom_call.1} parent=1 // pred_check_branch
      %100 = sbr.rel (0) target = $region45
    $region44: #{tpu_custom_call.1} parent=1 // pred_region
      _
    $region45: #{tpu_custom_call.1} parent=1 // pred_fallthru
      _
    // Predicated region
    $region46: #{tpu_custom_call.1} parent=1 // pred_check
      _
    $region47: #{tpu_custom_call.1} parent=1 // pred_check_branch
      %102 = sbr.rel (0) target = $region49
    $region48: #{tpu_custom_call.1} parent=1 // pred_region
      %103 = dma.done [#allocation3], 64
    $region49: #{tpu_custom_call.1} parent=1 // pred_fallthru
      _
    // Predicated region
    $region50: #{tpu_custom_call.1} parent=1 // pred_check
      _
    $region51: #{tpu_custom_call.1} parent=1 // pred_check_branch
      %105 = sbr.rel (0) target = $region53
    $region52: #{tpu_custom_call.1} parent=1 // pred_region
      %106 = dma.done [#allocation6], 1024
    $region53: #{tpu_custom_call.1} parent=1 // pred_fallthru
      _
    // Predicated region
    $region54: #{tpu_custom_call.1} parent=1 // pred_check
      _
    $region55: #{tpu_custom_call.1} parent=1 // pred_check_branch
      %108 = sbr.rel (0) target = $region57
    $region56: #{tpu_custom_call.1} parent=1 // pred_region
      %109 = dma.done [#allocation6], 2048
    $region57: #{tpu_custom_call.1} parent=1 // pred_fallthru
      _
    // Predicated region
    $region58: #{tpu_custom_call.1} parent=1 // pred_check
      _
    $region59: #{tpu_custom_call.1} parent=1 // pred_check_branch
      %111 = sbr.rel (0) target = $region61
    $region60: #{tpu_custom_call.1} parent=1 // pred_region
      %112 = dma.done [#allocation9], 8192
    $region61: #{tpu_custom_call.1} parent=1 // pred_fallthru
      _
    // Predicated region
    $region62: #{tpu_custom_call.1} parent=1 // pred_check
      _
    $region63: #{tpu_custom_call.1} parent=1 // pred_check_branch
      %114 = sbr.rel (0) target = $region65
    $region64: #{tpu_custom_call.1} parent=1 // pred_region
      %115 = dma.done [#allocation9], 32768
    $region65: #{tpu_custom_call.1} parent=1 // pred_fallthru
      _
    // Predicated region
    $region66: #{tpu_custom_call.1} parent=1 // pred_check
      _
    $region67: #{tpu_custom_call.1} parent=1 // pred_check_branch
      %117 = sbr.rel (0) target = $region69
    $region68: #{tpu_custom_call.1} parent=1 // pred_region
      %118 = dma.done [#allocation12], 8192
    $region69: #{tpu_custom_call.1} parent=1 // pred_fallthru
      _
    %v120 = vld [vmem:[#allocation2] sm:$0xf]
    %v121 = vld [vmem:[#allocation5] sm:$0xf]
    %v122 = vld [vmem:[#allocation5 + $0x4] sm:$0xf]
    %v123 = vld [vmem:[#allocation5 + $0x8] sm:$0xf]
    %v124 = vld [vmem:[#allocation5 + $0xc] sm:$0xf]
    %v125 = vld [vmem:[#allocation5 + $0x10] sm:$0xf]
    %v126 = vld [vmem:[#allocation5 + $0x14] sm:$0xf]
    %v127 = vld [vmem:[#allocation5 + $0x18] sm:$0xf]
    %v128 = vld [vmem:[#allocation5 + $0x1c] sm:$0xf]
    %v129 = vld [vmem:[#allocation5 + $0x20] sm:$0xf]
    %v130 = vld [vmem:[#allocation5 + $0x24] sm:$0xf]
    %v131 = vld [vmem:[#allocation5 + $0x28] sm:$0xf]
    %v132 = vld [vmem:[#allocation5 + $0x2c] sm:$0xf]
    %v133 = vld [vmem:[#allocation5 + $0x30] sm:$0xf]
    %v134 = vld [vmem:[#allocation5 + $0x34] sm:$0xf]
    %v135 = vld [vmem:[#allocation5 + $0x38] sm:$0xf]
    %v136 = vld [vmem:[#allocation5 + $0x3c] sm:$0xf]
    %v137 = vld [vmem:[%s2] sm:$0x1]
    %v139 = vlaneseq
    %v140 = vshrl.u32 %v139, 7
    %v141 = vsub.s32 0, %v140
    %v142 = vrot.slane %v137, %v141
    %v160 = vunpack.c.l.b16 %v121
    %v161 = vunpack.c.l.b16 %v122
    %v162 = vunpack.c.l.b16 %v123
    %v163 = vunpack.c.l.b16 %v124
    %v164 = vunpack.c.l.b16 %v125
    %v165 = vunpack.c.l.b16 %v126
    %v166 = vunpack.c.l.b16 %v127
    %v167 = vunpack.c.l.b16 %v128
    %v168 = vunpack.c.l.b16 %v129
    %v169 = vunpack.c.l.b16 %v130
    %v170 = vunpack.c.l.b16 %v131
    %v171 = vunpack.c.l.b16 %v132
    %v172 = vunpack.c.l.b16 %v133
    %v173 = vunpack.c.l.b16 %v134
    %v174 = vunpack.c.l.b16 %v135
    %v175 = vunpack.c.l.b16 %v136
    %v176 = vpack.c.b16 %v161, %v160
    %v177 = vpack.c.b16 %v163, %v162
    %v178 = vpack.c.b16 %v165, %v164
    %v179 = vpack.c.b16 %v167, %v166
    %v180 = vpack.c.b16 %v169, %v168
    %v181 = vpack.c.b16 %v171, %v170
    %v182 = vpack.c.b16 %v173, %v172
    %v183 = vpack.c.b16 %v175, %v174
    %192 = vmatprep.subr.bf16.mxu0 0
    %193 = vmatpush1.bf16.msra.mxu0 %v176
    %194 = vmatprep.subr.bf16.mxu0 0
    %195 = vmatpush1.bf16.msra.mxu0 %v177
    %196 = vmatprep.subr.bf16.mxu0 0
    %197 = vmatpush1.bf16.msra.mxu0 %v178
    %198 = vmatprep.subr.bf16.mxu0 0
    %199 = vmatpush1.bf16.msra.mxu0 %v179
    %200 = vmatprep.subr.bf16.mxu0 0
    %201 = vmatpush1.bf16.msra.mxu0 %v180
    %202 = vmatprep.subr.bf16.mxu0 0
    %203 = vmatpush1.bf16.msra.mxu0 %v181
    %204 = vmatprep.subr.bf16.mxu0 0
    %205 = vmatpush1.bf16.msra.mxu0 %v182
    %206 = vmatprep.subr.bf16.mxu0 0
    %207 = vmatpush1.bf16.msra.mxu0 %v183
    %208 = vmatprep.subr.bf16.mxu0 0
    %209 = vmatpush1.bf16.msra.mxu0 0
    %210 = vmatprep.subr.bf16.mxu0 0
    %211 = vmatpush1.bf16.msra.mxu0 0
    %212 = vmatprep.subr.bf16.mxu0 0
    %213 = vmatpush1.bf16.msra.mxu0 0
    %214 = vmatprep.subr.bf16.mxu0 0
    %215 = vmatpush1.bf16.msra.mxu0 0
    %216 = vmatprep.subr.bf16.mxu0 0
    %217 = vmatpush1.bf16.msra.mxu0 0
    %218 = vmatprep.subr.bf16.mxu0 0
    %219 = vmatpush1.bf16.msra.mxu0 0
    %220 = vmatprep.subr.bf16.mxu0 0
    %221 = vmatpush1.bf16.msra.mxu0 0
    %222 = vmatprep.subr.bf16.mxu0 0
    %223 = vmatpush1.bf16.msra.mxu0 0
    %224 = vmatprep.mubr.bf16.mxu0 0
    %225 = vmatmul.mubr.bf16.gmra.mrb[0].mxu0 %v120
    %v226 = vpop.f32.mrb[0].mxu0
    %v227 = vadd.f32 %v142, %v226
    %v228 = vpop.f32.mrb[0].mxu0
    %v229 = vpop.f32.mrb[0].mxu0
    %v230 = vpop.f32.mrb[0].mxu0
    %231 = vdwg.mxu0
    %v232 = vmax.f32 %v227, 0.0
    %v233 = vpack.c.bf16 %v232, %v232
    %v234 = vld [vmem:[#allocation7] sm:$0xff]
    %v235 = vld [vmem:[#allocation7 + $0x8] sm:$0xff]
    %v236 = vld [vmem:[#allocation7 + $0x10] sm:$0xff]
    %v237 = vld [vmem:[#allocation7 + $0x18] sm:$0xff]
    %v238 = vld [vmem:[#allocation7 + $0x20] sm:$0xff]
    %v239 = vld [vmem:[#allocation7 + $0x28] sm:$0xff]
    %v240 = vld [vmem:[#allocation7 + $0x30] sm:$0xff]
    %v241 = vld [vmem:[#allocation7 + $0x38] sm:$0xff]
    %v242 = vld [vmem:[#allocation7 + $0x40] sm:$0xff]
    %v243 = vld [vmem:[#allocation7 + $0x48] sm:$0xff]
    %v244 = vld [vmem:[#allocation7 + $0x50] sm:$0xff]
    %v245 = vld [vmem:[#allocation7 + $0x58] sm:$0xff]
    %v246 = vld [vmem:[#allocation7 + $0x60] sm:$0xff]
    %v247 = vld [vmem:[#allocation7 + $0x68] sm:$0xff]
    %v248 = vld [vmem:[#allocation7 + $0x70] sm:$0xff]
    %v249 = vld [vmem:[#allocation7 + $0x78] sm:$0xff]
    %v250 = vld [vmem:[%s4] sm:$0x3]
    %v252 = vlaneseq
    %v253 = vshrl.u32 %v252, 7
    %v254 = vsub.s32 0, %v253
    %v255 = vrot.slane %v250, %v254
    %v256 = vlaneseq
    %v257 = vshrl.u32 %v256, 7
    %v258 = vsub.s32 1, %v257
    %v259 = vrot.slane %v250, %v258
    %v278 = vunpack.c.l.b16 %v234
    %v279 = vunpack.c.h.b16 %v234
    %v280 = vunpack.c.l.b16 %v235
    %v281 = vunpack.c.h.b16 %v235
    %v282 = vunpack.c.l.b16 %v236
    %v283 = vunpack.c.h.b16 %v236
    %v284 = vunpack.c.l.b16 %v237
    %v285 = vunpack.c.h.b16 %v237
    %v286 = vunpack.c.l.b16 %v238
    %v287 = vunpack.c.h.b16 %v238
    %v288 = vunpack.c.l.b16 %v239
    %v289 = vunpack.c.h.b16 %v239
    %v290 = vunpack.c.l.b16 %v240
    %v291 = vunpack.c.h.b16 %v240
    %v292 = vunpack.c.l.b16 %v241
    %v293 = vunpack.c.h.b16 %v241
    %v294 = vunpack.c.l.b16 %v242
    %v295 = vunpack.c.h.b16 %v242
    %v296 = vunpack.c.l.b16 %v243
    %v297 = vunpack.c.h.b16 %v243
    %v298 = vunpack.c.l.b16 %v244
    %v299 = vunpack.c.h.b16 %v244
    %v300 = vunpack.c.l.b16 %v245
    %v301 = vunpack.c.h.b16 %v245
    %v302 = vunpack.c.l.b16 %v246
    %v303 = vunpack.c.h.b16 %v246
    %v304 = vunpack.c.l.b16 %v247
    %v305 = vunpack.c.h.b16 %v247
    %v306 = vunpack.c.l.b16 %v248
    %v307 = vunpack.c.h.b16 %v248
    %v308 = vunpack.c.l.b16 %v249
    %v309 = vunpack.c.h.b16 %v249
    %v310 = vpack.c.b16 %v280, %v278
    %v311 = vpack.c.b16 %v281, %v279
    %v312 = vpack.c.b16 %v284, %v282
    %v313 = vpack.c.b16 %v285, %v283
    %v314 = vpack.c.b16 %v288, %v286
    %v315 = vpack.c.b16 %v289, %v287
    %v316 = vpack.c.b16 %v292, %v290
    %v317 = vpack.c.b16 %v293, %v291
    %v318 = vpack.c.b16 %v296, %v294
    %v319 = vpack.c.b16 %v297, %v295
    %v320 = vpack.c.b16 %v300, %v298
    %v321 = vpack.c.b16 %v301, %v299
    %v322 = vpack.c.b16 %v304, %v302
    %v323 = vpack.c.b16 %v305, %v303
    %v324 = vpack.c.b16 %v308, %v306
    %v325 = vpack.c.b16 %v309, %v307
    %342 = vmatprep.subr.bf16.mxu0 %v311
    %343 = vmatpush1.bf16.msra.mxu0 %v310
    %344 = vmatprep.subr.bf16.mxu0 %v313
    %345 = vmatpush1.bf16.msra.mxu0 %v312
    %346 = vmatprep.subr.bf16.mxu0 %v315
    %347 = vmatpush1.bf16.msra.mxu0 %v314
    %348 = vmatprep.subr.bf16.mxu0 %v317
    %349 = vmatpush1.bf16.msra.mxu0 %v316
    %350 = vmatprep.subr.bf16.mxu0 %v319
    %351 = vmatpush1.bf16.msra.mxu0 %v318
    %352 = vmatprep.subr.bf16.mxu0 %v321
    %353 = vmatpush1.bf16.msra.mxu0 %v320
    %354 = vmatprep.subr.bf16.mxu0 %v323
    %355 = vmatpush1.bf16.msra.mxu0 %v322
    %356 = vmatprep.subr.bf16.mxu0 %v325
    %357 = vmatpush1.bf16.msra.mxu0 %v324
    %358 = vmatprep.subr.bf16.mxu0 0
    %359 = vmatpush1.bf16.msra.mxu0 0
    %360 = vmatprep.subr.bf16.mxu0 0
    %361 = vmatpush1.bf16.msra.mxu0 0
    %362 = vmatprep.subr.bf16.mxu0 0
    %363 = vmatpush1.bf16.msra.mxu0 0
    %364 = vmatprep.subr.bf16.mxu0 0
    %365 = vmatpush1.bf16.msra.mxu0 0
    %366 = vmatprep.subr.bf16.mxu0 0
    %367 = vmatpush1.bf16.msra.mxu0 0
    %368 = vmatprep.subr.bf16.mxu0 0
    %369 = vmatpush1.bf16.msra.mxu0 0
    %370 = vmatprep.subr.bf16.mxu0 0
    %371 = vmatpush1.bf16.msra.mxu0 0
    %372 = vmatprep.subr.bf16.mxu0 0
    %373 = vmatpush1.bf16.msra.mxu0 0
    %374 = vmatprep.mubr.bf16.mxu0 0
    %375 = vmatmul.mubr.bf16.gmra.mrb[0].mxu0 %v233
    %v376 = vpop.f32.mrb[0].mxu0
    %v377 = vadd.f32 %v255, %v376
    %v378 = vpop.f32.mrb[0].mxu0
    %v379 = vadd.f32 %v259, %v378
    %v380 = vpop.f32.mrb[0].mxu0
    %v381 = vpop.f32.mrb[0].mxu0
    %382 = vdwg.mxu0
    %v383 = vmax.f32 %v377, 0.0
    %v384 = vmax.f32 %v379, 0.0
    %v385 = vpack.c.bf16 %v383, %v383
    %v386 = vpack.c.bf16 %v384, %v384
    %v387 = vld [vmem:[#allocation8] sm:$0xff]
    %v388 = vld [vmem:[#allocation8 + $0x8] sm:$0xff]
    %v389 = vld [vmem:[#allocation8 + $0x10] sm:$0xff]
    %v390 = vld [vmem:[#allocation8 + $0x18] sm:$0xff]
    %v391 = vld [vmem:[#allocation8 + $0x20] sm:$0xff]
    %v392 = vld [vmem:[#allocation8 + $0x28] sm:$0xff]
    %v393 = vld [vmem:[#allocation8 + $0x30] sm:$0xff]
    %v394 = vld [vmem:[#allocation8 + $0x38] sm:$0xff]
    %v395 = vld [vmem:[#allocation8 + $0x40] sm:$0xff]
    %v396 = vld [vmem:[#allocation8 + $0x48] sm:$0xff]
    %v397 = vld [vmem:[#allocation8 + $0x50] sm:$0xff]
    %v398 = vld [vmem:[#allocation8 + $0x58] sm:$0xff]
    %v399 = vld [vmem:[#allocation8 + $0x60] sm:$0xff]
    %v400 = vld [vmem:[#allocation8 + $0x68] sm:$0xff]
    %v401 = vld [vmem:[#allocation8 + $0x70] sm:$0xff]
    %v402 = vld [vmem:[#allocation8 + $0x78] sm:$0xff]
    %v403 = vld [vmem:[#allocation8 + $0x80] sm:$0xff]
    %v404 = vld [vmem:[#allocation8 + $0x88] sm:$0xff]
    %v405 = vld [vmem:[#allocation8 + $0x90] sm:$0xff]
    %v406 = vld [vmem:[#allocation8 + $0x98] sm:$0xff]
    %v407 = vld [vmem:[#allocation8 + $0xa0] sm:$0xff]
    %v408 = vld [vmem:[#allocation8 + $0xa8] sm:$0xff]
    %v409 = vld [vmem:[#allocation8 + $0xb0] sm:$0xff]
    %v410 = vld [vmem:[#allocation8 + $0xb8] sm:$0xff]
    %v411 = vld [vmem:[#allocation8 + $0xc0] sm:$0xff]
    %v412 = vld [vmem:[#allocation8 + $0xc8] sm:$0xff]
    %v413 = vld [vmem:[#allocation8 + $0xd0] sm:$0xff]
    %v414 = vld [vmem:[#allocation8 + $0xd8] sm:$0xff]
    %v415 = vld [vmem:[#allocation8 + $0xe0] sm:$0xff]
    %v416 = vld [vmem:[#allocation8 + $0xe8] sm:$0xff]
    %v417 = vld [vmem:[#allocation8 + $0xf0] sm:$0xff]
    %v418 = vld [vmem:[#allocation8 + $0xf8] sm:$0xff]
    %v419 = vld [vmem:[#allocation8 + $0x100] sm:$0xff]
    %v420 = vld [vmem:[#allocation8 + $0x108] sm:$0xff]
    %v421 = vld [vmem:[#allocation8 + $0x110] sm:$0xff]
    %v422 = vld [vmem:[#allocation8 + $0x118] sm:$0xff]
    %v423 = vld [vmem:[#allocation8 + $0x120] sm:$0xff]
    %v424 = vld [vmem:[#allocation8 + $0x128] sm:$0xff]
    %v425 = vld [vmem:[#allocation8 + $0x130] sm:$0xff]
    %v426 = vld [vmem:[#allocation8 + $0x138] sm:$0xff]
    %v427 = vld [vmem:[#allocation8 + $0x140] sm:$0xff]
    %v428 = vld [vmem:[#allocation8 + $0x148] sm:$0xff]
    %v429 = vld [vmem:[#allocation8 + $0x150] sm:$0xff]
    %v430 = vld [vmem:[#allocation8 + $0x158] sm:$0xff]
    %v431 = vld [vmem:[#allocation8 + $0x160] sm:$0xff]
    %v432 = vld [vmem:[#allocation8 + $0x168] sm:$0xff]
    %v433 = vld [vmem:[#allocation8 + $0x170] sm:$0xff]
    %v434 = vld [vmem:[#allocation8 + $0x178] sm:$0xff]
    %v435 = vld [vmem:[#allocation8 + $0x180] sm:$0xff]
    %v436 = vld [vmem:[#allocation8 + $0x188] sm:$0xff]
    %v437 = vld [vmem:[#allocation8 + $0x190] sm:$0xff]
    %v438 = vld [vmem:[#allocation8 + $0x198] sm:$0xff]
    %v439 = vld [vmem:[#allocation8 + $0x1a0] sm:$0xff]
    %v440 = vld [vmem:[#allocation8 + $0x1a8] sm:$0xff]
    %v441 = vld [vmem:[#allocation8 + $0x1b0] sm:$0xff]
    %v442 = vld [vmem:[#allocation8 + $0x1b8] sm:$0xff]
    %v443 = vld [vmem:[#allocation8 + $0x1c0] sm:$0xff]
    %v444 = vld [vmem:[#allocation8 + $0x1c8] sm:$0xff]
    %v445 = vld [vmem:[#allocation8 + $0x1d0] sm:$0xff]
    %v446 = vld [vmem:[#allocation8 + $0x1d8] sm:$0xff]
    %v447 = vld [vmem:[#allocation8 + $0x1e0] sm:$0xff]
    %v448 = vld [vmem:[#allocation8 + $0x1e8] sm:$0xff]
    %v449 = vld [vmem:[#allocation8 + $0x1f0] sm:$0xff]
    %v450 = vld [vmem:[#allocation8 + $0x1f8] sm:$0xff]
    %v451 = vld [vmem:[%s6] sm:$0xf]
    %v453 = vlaneseq
    %v454 = vshrl.u32 %v453, 7
    %v455 = vsub.s32 0, %v454
    %v456 = vrot.slane %v451, %v455
    %v457 = vlaneseq
    %v458 = vshrl.u32 %v457, 7
    %v459 = vsub.s32 1, %v458
    %v460 = vrot.slane %v451, %v459
    %v461 = vlaneseq
    %v462 = vshrl.u32 %v461, 7
    %v463 = vsub.s32 2, %v462
    %v464 = vrot.slane %v451, %v463
    %v465 = vlaneseq
    %v466 = vshrl.u32 %v465, 7
    %v467 = vsub.s32 3, %v466
    %v468 = vrot.slane %v451, %v467
    %v537 = vunpack.c.l.b16 %v387
    %v538 = vunpack.c.h.b16 %v387
    %v539 = vunpack.c.l.b16 %v388
    %v540 = vunpack.c.h.b16 %v388
    %v541 = vunpack.c.l.b16 %v389
    %v542 = vunpack.c.h.b16 %v389
    %v543 = vunpack.c.l.b16 %v390
    %v544 = vunpack.c.h.b16 %v390
    %v545 = vunpack.c.l.b16 %v391
    %v546 = vunpack.c.h.b16 %v391
    %v547 = vunpack.c.l.b16 %v392
    %v548 = vunpack.c.h.b16 %v392
    %v549 = vunpack.c.l.b16 %v393
    %v550 = vunpack.c.h.b16 %v393
    %v551 = vunpack.c.l.b16 %v394
    %v552 = vunpack.c.h.b16 %v394
    %v553 = vunpack.c.l.b16 %v395
    %v554 = vunpack.c.h.b16 %v395
    %v555 = vunpack.c.l.b16 %v396
    %v556 = vunpack.c.h.b16 %v396
    %v557 = vunpack.c.l.b16 %v397
    %v558 = vunpack.c.h.b16 %v397
    %v559 = vunpack.c.l.b16 %v398
    %v560 = vunpack.c.h.b16 %v398
    %v561 = vunpack.c.l.b16 %v399
    %v562 = vunpack.c.h.b16 %v399
    %v563 = vunpack.c.l.b16 %v400
    %v564 = vunpack.c.h.b16 %v400
    %v565 = vunpack.c.l.b16 %v401
    %v566 = vunpack.c.h.b16 %v401
    %v567 = vunpack.c.l.b16 %v402
    %v568 = vunpack.c.h.b16 %v402
    %v569 = vunpack.c.l.b16 %v403
    %v570 = vunpack.c.h.b16 %v403
    %v571 = vunpack.c.l.b16 %v404
    %v572 = vunpack.c.h.b16 %v404
    %v573 = vunpack.c.l.b16 %v405
    %v574 = vunpack.c.h.b16 %v405
    %v575 = vunpack.c.l.b16 %v406
    %v576 = vunpack.c.h.b16 %v406
    %v577 = vunpack.c.l.b16 %v407
    %v578 = vunpack.c.h.b16 %v407
    %v579 = vunpack.c.l.b16 %v408
    %v580 = vunpack.c.h.b16 %v408
    %v581 = vunpack.c.l.b16 %v409
    %v582 = vunpack.c.h.b16 %v409
    %v583 = vunpack.c.l.b16 %v410
    %v584 = vunpack.c.h.b16 %v410
    %v585 = vunpack.c.l.b16 %v411
    %v586 = vunpack.c.h.b16 %v411
    %v587 = vunpack.c.l.b16 %v412
    %v588 = vunpack.c.h.b16 %v412
    %v589 = vunpack.c.l.b16 %v413
    %v590 = vunpack.c.h.b16 %v413
    %v591 = vunpack.c.l.b16 %v414
    %v592 = vunpack.c.h.b16 %v414
    %v593 = vunpack.c.l.b16 %v415
    %v594 = vunpack.c.h.b16 %v415
    %v595 = vunpack.c.l.b16 %v416
    %v596 = vunpack.c.h.b16 %v416
    %v597 = vunpack.c.l.b16 %v417
    %v598 = vunpack.c.h.b16 %v417
    %v599 = vunpack.c.l.b16 %v418
    %v600 = vunpack.c.h.b16 %v418
    %v601 = vunpack.c.l.b16 %v419
    %v602 = vunpack.c.h.b16 %v419
    %v603 = vunpack.c.l.b16 %v420
    %v604 = vunpack.c.h.b16 %v420
    %v605 = vunpack.c.l.b16 %v421
    %v606 = vunpack.c.h.b16 %v421
    %v607 = vunpack.c.l.b16 %v422
    %v608 = vunpack.c.h.b16 %v422
    %v609 = vunpack.c.l.b16 %v423
    %v610 = vunpack.c.h.b16 %v423
    %v611 = vunpack.c.l.b16 %v424
    %v612 = vunpack.c.h.b16 %v424
    %v613 = vunpack.c.l.b16 %v425
    %v614 = vunpack.c.h.b16 %v425
    %v615 = vunpack.c.l.b16 %v426
    %v616 = vunpack.c.h.b16 %v426
    %v617 = vunpack.c.l.b16 %v427
    %v618 = vunpack.c.h.b16 %v427
    %v619 = vunpack.c.l.b16 %v428
    %v620 = vunpack.c.h.b16 %v428
    %v621 = vunpack.c.l.b16 %v429
    %v622 = vunpack.c.h.b16 %v429
    %v623 = vunpack.c.l.b16 %v430
    %v624 = vunpack.c.h.b16 %v430
    %v625 = vunpack.c.l.b16 %v431
    %v626 = vunpack.c.h.b16 %v431
    %v627 = vunpack.c.l.b16 %v432
    %v628 = vunpack.c.h.b16 %v432
    %v629 = vunpack.c.l.b16 %v433
    %v630 = vunpack.c.h.b16 %v433
    %v631 = vunpack.c.l.b16 %v434
    %v632 = vunpack.c.h.b16 %v434
    %v633 = vunpack.c.l.b16 %v435
    %v634 = vunpack.c.h.b16 %v435
    %v635 = vunpack.c.l.b16 %v436
    %v636 = vunpack.c.h.b16 %v436
    %v637 = vunpack.c.l.b16 %v437
    %v638 = vunpack.c.h.b16 %v437
    %v639 = vunpack.c.l.b16 %v438
    %v640 = vunpack.c.h.b16 %v438
    %v641 = vunpack.c.l.b16 %v439
    %v642 = vunpack.c.h.b16 %v439
    %v643 = vunpack.c.l.b16 %v440
    %v644 = vunpack.c.h.b16 %v440
    %v645 = vunpack.c.l.b16 %v441
    %v646 = vunpack.c.h.b16 %v441
    %v647 = vunpack.c.l.b16 %v442
    %v648 = vunpack.c.h.b16 %v442
    %v649 = vunpack.c.l.b16 %v443
    %v650 = vunpack.c.h.b16 %v443
    %v651 = vunpack.c.l.b16 %v444
    %v652 = vunpack.c.h.b16 %v444
    %v653 = vunpack.c.l.b16 %v445
    %v654 = vunpack.c.h.b16 %v445
    %v655 = vunpack.c.l.b16 %v446
    %v656 = vunpack.c.h.b16 %v446
    %v657 = vunpack.c.l.b16 %v447
    %v658 = vunpack.c.h.b16 %v447
    %v659 = vunpack.c.l.b16 %v448
    %v660 = vunpack.c.h.b16 %v448
    %v661 = vunpack.c.l.b16 %v449
    %v662 = vunpack.c.h.b16 %v449
    %v663 = vunpack.c.l.b16 %v450
    %v664 = vunpack.c.h.b16 %v450
    %v665 = vpack.c.b16 %v541, %v537
    %v666 = vpack.c.b16 %v542, %v538
    %v667 = vpack.c.b16 %v543, %v539
    %v668 = vpack.c.b16 %v544, %v540
    %v669 = vpack.c.b16 %v549, %v545
    %v670 = vpack.c.b16 %v550, %v546
    %v671 = vpack.c.b16 %v551, %v547
    %v672 = vpack.c.b16 %v552, %v548
    %v673 = vpack.c.b16 %v557, %v553
    %v674 = vpack.c.b16 %v558, %v554
    %v675 = vpack.c.b16 %v559, %v555
    %v676 = vpack.c.b16 %v560, %v556
    %v677 = vpack.c.b16 %v565, %v561
    %v678 = vpack.c.b16 %v566, %v562
    %v679 = vpack.c.b16 %v567, %v563
    %v680 = vpack.c.b16 %v568, %v564
    %v681 = vpack.c.b16 %v573, %v569
    %v682 = vpack.c.b16 %v574, %v570
    %v683 = vpack.c.b16 %v575, %v571
    %v684 = vpack.c.b16 %v576, %v572
    %v685 = vpack.c.b16 %v581, %v577
    %v686 = vpack.c.b16 %v582, %v578
    %v687 = vpack.c.b16 %v583, %v579
    %v688 = vpack.c.b16 %v584, %v580
    %v689 = vpack.c.b16 %v589, %v585
    %v690 = vpack.c.b16 %v590, %v586
    %v691 = vpack.c.b16 %v591, %v587
    %v692 = vpack.c.b16 %v592, %v588
    %v693 = vpack.c.b16 %v597, %v593
    %v694 = vpack.c.b16 %v598, %v594
    %v695 = vpack.c.b16 %v599, %v595
    %v696 = vpack.c.b16 %v600, %v596
    %v697 = vpack.c.b16 %v605, %v601
    %v698 = vpack.c.b16 %v606, %v602
    %v699 = vpack.c.b16 %v607, %v603
    %v700 = vpack.c.b16 %v608, %v604
    %v701 = vpack.c.b16 %v613, %v609
    %v702 = vpack.c.b16 %v614, %v610
    %v703 = vpack.c.b16 %v615, %v611
    %v704 = vpack.c.b16 %v616, %v612
    %v705 = vpack.c.b16 %v621, %v617
    %v706 = vpack.c.b16 %v622, %v618
    %v707 = vpack.c.b16 %v623, %v619
    %v708 = vpack.c.b16 %v624, %v620
    %v709 = vpack.c.b16 %v629, %v625
    %v710 = vpack.c.b16 %v630, %v626
    %v711 = vpack.c.b16 %v631, %v627
    %v712 = vpack.c.b16 %v632, %v628
    %v713 = vpack.c.b16 %v637, %v633
    %v714 = vpack.c.b16 %v638, %v634
    %v715 = vpack.c.b16 %v639, %v635
    %v716 = vpack.c.b16 %v640, %v636
    %v717 = vpack.c.b16 %v645, %v641
    %v718 = vpack.c.b16 %v646, %v642
    %v719 = vpack.c.b16 %v647, %v643
    %v720 = vpack.c.b16 %v648, %v644
    %v721 = vpack.c.b16 %v653, %v649
    %v722 = vpack.c.b16 %v654, %v650
    %v723 = vpack.c.b16 %v655, %v651
    %v724 = vpack.c.b16 %v656, %v652
    %v725 = vpack.c.b16 %v661, %v657
    %v726 = vpack.c.b16 %v662, %v658
    %v727 = vpack.c.b16 %v663, %v659
    %v728 = vpack.c.b16 %v664, %v660
    %793 = vmatprep.subr.bf16.mxu0 %v666
    %794 = vmatpush1.bf16.msra.mxu0 %v665
    %795 = vmatprep.subr.bf16.mxu0 %v670
    %796 = vmatpush1.bf16.msra.mxu0 %v669
    %797 = vmatprep.subr.bf16.mxu0 %v674
    %798 = vmatpush1.bf16.msra.mxu0 %v673
    %799 = vmatprep.subr.bf16.mxu0 %v678
    %800 = vmatpush1.bf16.msra.mxu0 %v677
    %801 = vmatprep.subr.bf16.mxu0 %v682
    %802 = vmatpush1.bf16.msra.mxu0 %v681
    %803 = vmatprep.subr.bf16.mxu0 %v686
    %804 = vmatpush1.bf16.msra.mxu0 %v685
    %805 = vmatprep.subr.bf16.mxu0 %v690
    %806 = vmatpush1.bf16.msra.mxu0 %v689
    %807 = vmatprep.subr.bf16.mxu0 %v694
    %808 = vmatpush1.bf16.msra.mxu0 %v693
    %809 = vmatprep.subr.bf16.mxu0 %v698
    %810 = vmatpush1.bf16.msra.mxu0 %v697
    %811 = vmatprep.subr.bf16.mxu0 %v702
    %812 = vmatpush1.bf16.msra.mxu0 %v701
    %813 = vmatprep.subr.bf16.mxu0 %v706
    %814 = vmatpush1.bf16.msra.mxu0 %v705
    %815 = vmatprep.subr.bf16.mxu0 %v710
    %816 = vmatpush1.bf16.msra.mxu0 %v709
    %817 = vmatprep.subr.bf16.mxu0 %v714
    %818 = vmatpush1.bf16.msra.mxu0 %v713
    %819 = vmatprep.subr.bf16.mxu0 %v718
    %820 = vmatpush1.bf16.msra.mxu0 %v717
    %821 = vmatprep.subr.bf16.mxu0 %v722
    %822 = vmatpush1.bf16.msra.mxu0 %v721
    %823 = vmatprep.subr.bf16.mxu0 %v726
    %824 = vmatpush1.bf16.msra.mxu0 %v725
    %825 = vmatprep.mubr.bf16.mxu0 %v386
    %826 = vmatmul.mubr.bf16.gmra.mrb[0].mxu0 %v385
    %v827 = vpop.f32.mrb[0].mxu0
    %v828 = vadd.f32 %v456, %v827
    %v829 = vpop.f32.mrb[0].mxu0
    %v830 = vadd.f32 %v460, %v829
    %v831 = vpop.f32.mrb[0].mxu0
    %v832 = vpop.f32.mrb[0].mxu0
    %833 = vdwg.mxu0
    %834 = vmatprep.subr.bf16.mxu0 %v668
    %835 = vmatpush1.bf16.msra.mxu0 %v667
    %836 = vmatprep.subr.bf16.mxu0 %v672
    %837 = vmatpush1.bf16.msra.mxu0 %v671
    %838 = vmatprep.subr.bf16.mxu0 %v676
    %839 = vmatpush1.bf16.msra.mxu0 %v675
    %840 = vmatprep.subr.bf16.mxu0 %v680
    %841 = vmatpush1.bf16.msra.mxu0 %v679
    %842 = vmatprep.subr.bf16.mxu0 %v684
    %843 = vmatpush1.bf16.msra.mxu0 %v683
    %844 = vmatprep.subr.bf16.mxu0 %v688
    %845 = vmatpush1.bf16.msra.mxu0 %v687
    %846 = vmatprep.subr.bf16.mxu0 %v692
    %847 = vmatpush1.bf16.msra.mxu0 %v691
    %848 = vmatprep.subr.bf16.mxu0 %v696
    %849 = vmatpush1.bf16.msra.mxu0 %v695
    %850 = vmatprep.subr.bf16.mxu0 %v700
    %851 = vmatpush1.bf16.msra.mxu0 %v699
    %852 = vmatprep.subr.bf16.mxu0 %v704
    %853 = vmatpush1.bf16.msra.mxu0 %v703
    %854 = vmatprep.subr.bf16.mxu0 %v708
    %855 = vmatpush1.bf16.msra.mxu0 %v707
    %856 = vmatprep.subr.bf16.mxu0 %v712
    %857 = vmatpush1.bf16.msra.mxu0 %v711
    %858 = vmatprep.subr.bf16.mxu0 %v716
    %859 = vmatpush1.bf16.msra.mxu0 %v715
    %860 = vmatprep.subr.bf16.mxu0 %v720
    %861 = vmatpush1.bf16.msra.mxu0 %v719
    %862 = vmatprep.subr.bf16.mxu0 %v724
    %863 = vmatpush1.bf16.msra.mxu0 %v723
    %864 = vmatprep.subr.bf16.mxu0 %v728
    %865 = vmatpush1.bf16.msra.mxu0 %v727
    %866 = vmatprep.mubr.bf16.mxu0 %v386
    %867 = vmatmul.mubr.bf16.gmra.mrb[0].mxu0 %v385
    %v868 = vpop.f32.mrb[0].mxu0
    %v869 = vadd.f32 %v464, %v868
    %v870 = vpop.f32.mrb[0].mxu0
    %v871 = vadd.f32 %v468, %v870
    %v872 = vpop.f32.mrb[0].mxu0
    %v873 = vpop.f32.mrb[0].mxu0
    %874 = vdwg.mxu0
    %v875 = vmax.f32 %v828, 0.0
    %v876 = vmax.f32 %v830, 0.0
    %v877 = vmax.f32 %v869, 0.0
    %v878 = vmax.f32 %v871, 0.0
    %v879 = vpack.c.bf16 %v875, %v875
    %v880 = vpack.c.bf16 %v876, %v876
    %v881 = vpack.c.bf16 %v877, %v877
    %v882 = vpack.c.bf16 %v878, %v878
    %v883 = vld [vmem:[#allocation10] sm:$0xff]
    %v884 = vld [vmem:[#allocation10 + $0x8] sm:$0xff]
    %v885 = vld [vmem:[#allocation10 + $0x10] sm:$0xff]
    %v886 = vld [vmem:[#allocation10 + $0x18] sm:$0xff]
    %v887 = vld [vmem:[#allocation10 + $0x20] sm:$0xff]
    %v888 = vld [vmem:[#allocation10 + $0x28] sm:$0xff]
    %v889 = vld [vmem:[#allocation10 + $0x30] sm:$0xff]
    %v890 = vld [vmem:[#allocation10 + $0x38] sm:$0xff]
    %v891 = vld [vmem:[#allocation10 + $0x40] sm:$0xff]
    %v892 = vld [vmem:[#allocation10 + $0x48] sm:$0xff]
    %v893 = vld [vmem:[#allocation10 + $0x50] sm:$0xff]
    %v894 = vld [vmem:[#allocation10 + $0x58] sm:$0xff]
    %v895 = vld [vmem:[#allocation10 + $0x60] sm:$0xff]
    %v896 = vld [vmem:[#allocation10 + $0x68] sm:$0xff]
    %v897 = vld [vmem:[#allocation10 + $0x70] sm:$0xff]
    %v898 = vld [vmem:[#allocation10 + $0x78] sm:$0xff]
    %v899 = vld [vmem:[#allocation10 + $0x80] sm:$0xff]
    %v900 = vld [vmem:[#allocation10 + $0x88] sm:$0xff]
    %v901 = vld [vmem:[#allocation10 + $0x90] sm:$0xff]
    %v902 = vld [vmem:[#allocation10 + $0x98] sm:$0xff]
    %v903 = vld [vmem:[#allocation10 + $0xa0] sm:$0xff]
    %v904 = vld [vmem:[#allocation10 + $0xa8] sm:$0xff]
    %v905 = vld [vmem:[#allocation10 + $0xb0] sm:$0xff]
    %v906 = vld [vmem:[#allocation10 + $0xb8] sm:$0xff]
    %v907 = vld [vmem:[#allocation10 + $0xc0] sm:$0xff]
    %v908 = vld [vmem:[#allocation10 + $0xc8] sm:$0xff]
    %v909 = vld [vmem:[#allocation10 + $0xd0] sm:$0xff]
    %v910 = vld [vmem:[#allocation10 + $0xd8] sm:$0xff]
    %v911 = vld [vmem:[#allocation10 + $0xe0] sm:$0xff]
    %v912 = vld [vmem:[#allocation10 + $0xe8] sm:$0xff]
    %v913 = vld [vmem:[#allocation10 + $0xf0] sm:$0xff]
    %v914 = vld [vmem:[#allocation10 + $0xf8] sm:$0xff]
    %v915 = vld [vmem:[#allocation10 + $0x100] sm:$0xff]
    %v916 = vld [vmem:[#allocation10 + $0x108] sm:$0xff]
    %v917 = vld [vmem:[#allocation10 + $0x110] sm:$0xff]
    %v918 = vld [vmem:[#allocation10 + $0x118] sm:$0xff]
    %v919 = vld [vmem:[#allocation10 + $0x120] sm:$0xff]
    %v920 = vld [vmem:[#allocation10 + $0x128] sm:$0xff]
    %v921 = vld [vmem:[#allocation10 + $0x130] sm:$0xff]
    %v922 = vld [vmem:[#allocation10 + $0x138] sm:$0xff]
    %v923 = vld [vmem:[#allocation10 + $0x140] sm:$0xff]
    %v924 = vld [vmem:[#allocation10 + $0x148] sm:$0xff]
    %v925 = vld [vmem:[#allocation10 + $0x150] sm:$0xff]
    %v926 = vld [vmem:[#allocation10 + $0x158] sm:$0xff]
    %v927 = vld [vmem:[#allocation10 + $0x160] sm:$0xff]
    %v928 = vld [vmem:[#allocation10 + $0x168] sm:$0xff]
    %v929 = vld [vmem:[#allocation10 + $0x170] sm:$0xff]
    %v930 = vld [vmem:[#allocation10 + $0x178] sm:$0xff]
    %v931 = vld [vmem:[#allocation10 + $0x180] sm:$0xff]
    %v932 = vld [vmem:[#allocation10 + $0x188] sm:$0xff]
    %v933 = vld [vmem:[#allocation10 + $0x190] sm:$0xff]
    %v934 = vld [vmem:[#allocation10 + $0x198] sm:$0xff]
    %v935 = vld [vmem:[#allocation10 + $0x1a0] sm:$0xff]
    %v936 = vld [vmem:[#allocation10 + $0x1a8] sm:$0xff]
    %v937 = vld [vmem:[#allocation10 + $0x1b0] sm:$0xff]
    %v938 = vld [vmem:[#allocation10 + $0x1b8] sm:$0xff]
    %v939 = vld [vmem:[#allocation10 + $0x1c0] sm:$0xff]
    %v940 = vld [vmem:[#allocation10 + $0x1c8] sm:$0xff]
    %v941 = vld [vmem:[#allocation10 + $0x1d0] sm:$0xff]
    %v942 = vld [vmem:[#allocation10 + $0x1d8] sm:$0xff]
    %v943 = vld [vmem:[#allocation10 + $0x1e0] sm:$0xff]
    %v944 = vld [vmem:[#allocation10 + $0x1e8] sm:$0xff]
    %v945 = vld [vmem:[#allocation10 + $0x1f0] sm:$0xff]
    %v946 = vld [vmem:[#allocation10 + $0x1f8] sm:$0xff]
    %v947 = vld [vmem:[#allocation10 + $0x200] sm:$0xff]
    %v948 = vld [vmem:[#allocation10 + $0x208] sm:$0xff]
    %v949 = vld [vmem:[#allocation10 + $0x210] sm:$0xff]
    %v950 = vld [vmem:[#allocation10 + $0x218] sm:$0xff]
    %v951 = vld [vmem:[#allocation10 + $0x220] sm:$0xff]
    %v952 = vld [vmem:[#allocation10 + $0x228] sm:$0xff]
    %v953 = vld [vmem:[#allocation10 + $0x230] sm:$0xff]
    %v954 = vld [vmem:[#allocation10 + $0x238] sm:$0xff]
    %v955 = vld [vmem:[#allocation10 + $0x240] sm:$0xff]
    %v956 = vld [vmem:[#allocation10 + $0x248] sm:$0xff]
    %v957 = vld [vmem:[#allocation10 + $0x250] sm:$0xff]
    %v958 = vld [vmem:[#allocation10 + $0x258] sm:$0xff]
    %v959 = vld [vmem:[#allocation10 + $0x260] sm:$0xff]
    %v960 = vld [vmem:[#allocation10 + $0x268] sm:$0xff]
    %v961 = vld [vmem:[#allocation10 + $0x270] sm:$0xff]
    %v962 = vld [vmem:[#allocation10 + $0x278] sm:$0xff]
    %v963 = vld [vmem:[#allocation10 + $0x280] sm:$0xff]
    %v964 = vld [vmem:[#allocation10 + $0x288] sm:$0xff]
    %v965 = vld [vmem:[#allocation10 + $0x290] sm:$0xff]
    %v966 = vld [vmem:[#allocation10 + $0x298] sm:$0xff]
    %v967 = vld [vmem:[#allocation10 + $0x2a0] sm:$0xff]
    %v968 = vld [vmem:[#allocation10 + $0x2a8] sm:$0xff]
    %v969 = vld [vmem:[#allocation10 + $0x2b0] sm:$0xff]
    %v970 = vld [vmem:[#allocation10 + $0x2b8] sm:$0xff]
    %v971 = vld [vmem:[#allocation10 + $0x2c0] sm:$0xff]
    %v972 = vld [vmem:[#allocation10 + $0x2c8] sm:$0xff]
    %v973 = vld [vmem:[#allocation10 + $0x2d0] sm:$0xff]
    %v974 = vld [vmem:[#allocation10 + $0x2d8] sm:$0xff]
    %v975 = vld [vmem:[#allocation10 + $0x2e0] sm:$0xff]
    %v976 = vld [vmem:[#allocation10 + $0x2e8] sm:$0xff]
    %v977 = vld [vmem:[#allocation10 + $0x2f0] sm:$0xff]
    %v978 = vld [vmem:[#allocation10 + $0x2f8] sm:$0xff]
    %v979 = vld [vmem:[#allocation10 + $0x300] sm:$0xff]
    %v980 = vld [vmem:[#allocation10 + $0x308] sm:$0xff]
    %v981 = vld [vmem:[#allocation10 + $0x310] sm:$0xff]
    %v982 = vld [vmem:[#allocation10 + $0x318] sm:$0xff]
    %v983 = vld [vmem:[#allocation10 + $0x320] sm:$0xff]
    %v984 = vld [vmem:[#allocation10 + $0x328] sm:$0xff]
    %v985 = vld [vmem:[#allocation10 + $0x330] sm:$0xff]
    %v986 = vld [vmem:[#allocation10 + $0x338] sm:$0xff]
    %v987 = vld [vmem:[#allocation10 + $0x340] sm:$0xff]
    %v988 = vld [vmem:[#allocation10 + $0x348] sm:$0xff]
    %v989 = vld [vmem:[#allocation10 + $0x350] sm:$0xff]
    %v990 = vld [vmem:[#allocation10 + $0x358] sm:$0xff]
    %v991 = vld [vmem:[#allocation10 + $0x360] sm:$0xff]
    %v992 = vld [vmem:[#allocation10 + $0x368] sm:$0xff]
    %v993 = vld [vmem:[#allocation10 + $0x370] sm:$0xff]
    %v994 = vld [vmem:[#allocation10 + $0x378] sm:$0xff]
    %v995 = vld [vmem:[#allocation10 + $0x380] sm:$0xff]
    %v996 = vld [vmem:[#allocation10 + $0x388] sm:$0xff]
    %v997 = vld [vmem:[#allocation10 + $0x390] sm:$0xff]
    %v998 = vld [vmem:[#allocation10 + $0x398] sm:$0xff]
    %v999 = vld [vmem:[#allocation10 + $0x3a0] sm:$0xff]
    %v1000 = vld [vmem:[#allocation10 + $0x3a8] sm:$0xff]
    %v1001 = vld [vmem:[#allocation10 + $0x3b0] sm:$0xff]
    %v1002 = vld [vmem:[#allocation10 + $0x3b8] sm:$0xff]
    %v1003 = vld [vmem:[#allocation10 + $0x3c0] sm:$0xff]
    %v1004 = vld [vmem:[#allocation10 + $0x3c8] sm:$0xff]
    %v1005 = vld [vmem:[#allocation10 + $0x3d0] sm:$0xff]
    %v1006 = vld [vmem:[#allocation10 + $0x3d8] sm:$0xff]
    %v1007 = vld [vmem:[#allocation10 + $0x3e0] sm:$0xff]
    %v1008 = vld [vmem:[#allocation10 + $0x3e8] sm:$0xff]
    %v1009 = vld [vmem:[#allocation10 + $0x3f0] sm:$0xff]
    %v1010 = vld [vmem:[#allocation10 + $0x3f8] sm:$0xff]
    %v1011 = vld [vmem:[#allocation10 + $0x400] sm:$0xff]
    %v1012 = vld [vmem:[#allocation10 + $0x408] sm:$0xff]
    %v1013 = vld [vmem:[#allocation10 + $0x410] sm:$0xff]
    %v1014 = vld [vmem:[#allocation10 + $0x418] sm:$0xff]
    %v1015 = vld [vmem:[#allocation10 + $0x420] sm:$0xff]
    %v1016 = vld [vmem:[#allocation10 + $0x428] sm:$0xff]
    %v1017 = vld [vmem:[#allocation10 + $0x430] sm:$0xff]
    %v1018 = vld [vmem:[#allocation10 + $0x438] sm:$0xff]
    %v1019 = vld [vmem:[#allocation10 + $0x440] sm:$0xff]
    %v1020 = vld [vmem:[#allocation10 + $0x448] sm:$0xff]
    %v1021 = vld [vmem:[#allocation10 + $0x450] sm:$0xff]
    %v1022 = vld [vmem:[#allocation10 + $0x458] sm:$0xff]
    %v1023 = vld [vmem:[#allocation10 + $0x460] sm:$0xff]
    %v1024 = vld [vmem:[#allocation10 + $0x468] sm:$0xff]
    %v1025 = vld [vmem:[#allocation10 + $0x470] sm:$0xff]
    %v1026 = vld [vmem:[#allocation10 + $0x478] sm:$0xff]
    %v1027 = vld [vmem:[#allocation10 + $0x480] sm:$0xff]
    %v1028 = vld [vmem:[#allocation10 + $0x488] sm:$0xff]
    %v1029 = vld [vmem:[#allocation10 + $0x490] sm:$0xff]
    %v1030 = vld [vmem:[#allocation10 + $0x498] sm:$0xff]
    %v1031 = vld [vmem:[#allocation10 + $0x4a0] sm:$0xff]
    %v1032 = vld [vmem:[#allocation10 + $0x4a8] sm:$0xff]
    %v1033 = vld [vmem:[#allocation10 + $0x4b0] sm:$0xff]
    %v1034 = vld [vmem:[#allocation10 + $0x4b8] sm:$0xff]
    %v1035 = vld [vmem:[#allocation10 + $0x4c0] sm:$0xff]
    %v1036 = vld [vmem:[#allocation10 + $0x4c8] sm:$0xff]
    %v1037 = vld [vmem:[#allocation10 + $0x4d0] sm:$0xff]
    %v1038 = vld [vmem:[#allocation10 + $0x4d8] sm:$0xff]
    %v1039 = vld [vmem:[#allocation10 + $0x4e0] sm:$0xff]
    %v1040 = vld [vmem:[#allocation10 + $0x4e8] sm:$0xff]
    %v1041 = vld [vmem:[#allocation10 + $0x4f0] sm:$0xff]
    %v1042 = vld [vmem:[#allocation10 + $0x4f8] sm:$0xff]
    %v1043 = vld [vmem:[#allocation10 + $0x500] sm:$0xff]
    %v1044 = vld [vmem:[#allocation10 + $0x508] sm:$0xff]
    %v1045 = vld [vmem:[#allocation10 + $0x510] sm:$0xff]
    %v1046 = vld [vmem:[#allocation10 + $0x518] sm:$0xff]
    %v1047 = vld [vmem:[#allocation10 + $0x520] sm:$0xff]
    %v1048 = vld [vmem:[#allocation10 + $0x528] sm:$0xff]
    %v1049 = vld [vmem:[#allocation10 + $0x530] sm:$0xff]
    %v1050 = vld [vmem:[#allocation10 + $0x538] sm:$0xff]
    %v1051 = vld [vmem:[#allocation10 + $0x540] sm:$0xff]
    %v1052 = vld [vmem:[#allocation10 + $0x548] sm:$0xff]
    %v1053 = vld [vmem:[#allocation10 + $0x550] sm:$0xff]
    %v1054 = vld [vmem:[#allocation10 + $0x558] sm:$0xff]
    %v1055 = vld [vmem:[#allocation10 + $0x560] sm:$0xff]
    %v1056 = vld [vmem:[#allocation10 + $0x568] sm:$0xff]
    %v1057 = vld [vmem:[#allocation10 + $0x570] sm:$0xff]
    %v1058 = vld [vmem:[#allocation10 + $0x578] sm:$0xff]
    %v1059 = vld [vmem:[#allocation10 + $0x580] sm:$0xff]
    %v1060 = vld [vmem:[#allocation10 + $0x588] sm:$0xff]
    %v1061 = vld [vmem:[#allocation10 + $0x590] sm:$0xff]
    %v1062 = vld [vmem:[#allocation10 + $0x598] sm:$0xff]
    %v1063 = vld [vmem:[#allocation10 + $0x5a0] sm:$0xff]
    %v1064 = vld [vmem:[#allocation10 + $0x5a8] sm:$0xff]
    %v1065 = vld [vmem:[#allocation10 + $0x5b0] sm:$0xff]
    %v1066 = vld [vmem:[#allocation10 + $0x5b8] sm:$0xff]
    %v1067 = vld [vmem:[#allocation10 + $0x5c0] sm:$0xff]
    %v1068 = vld [vmem:[#allocation10 + $0x5c8] sm:$0xff]
    %v1069 = vld [vmem:[#allocation10 + $0x5d0] sm:$0xff]
    %v1070 = vld [vmem:[#allocation10 + $0x5d8] sm:$0xff]
    %v1071 = vld [vmem:[#allocation10 + $0x5e0] sm:$0xff]
    %v1072 = vld [vmem:[#allocation10 + $0x5e8] sm:$0xff]
    %v1073 = vld [vmem:[#allocation10 + $0x5f0] sm:$0xff]
    %v1074 = vld [vmem:[#allocation10 + $0x5f8] sm:$0xff]
    %v1075 = vld [vmem:[#allocation10 + $0x600] sm:$0xff]
    %v1076 = vld [vmem:[#allocation10 + $0x608] sm:$0xff]
    %v1077 = vld [vmem:[#allocation10 + $0x610] sm:$0xff]
    %v1078 = vld [vmem:[#allocation10 + $0x618] sm:$0xff]
    %v1079 = vld [vmem:[#allocation10 + $0x620] sm:$0xff]
    %v1080 = vld [vmem:[#allocation10 + $0x628] sm:$0xff]
    %v1081 = vld [vmem:[#allocation10 + $0x630] sm:$0xff]
    %v1082 = vld [vmem:[#allocation10 + $0x638] sm:$0xff]
    %v1083 = vld [vmem:[#allocation10 + $0x640] sm:$0xff]
    %v1084 = vld [vmem:[#allocation10 + $0x648] sm:$0xff]
    %v1085 = vld [vmem:[#allocation10 + $0x650] sm:$0xff]
    %v1086 = vld [vmem:[#allocation10 + $0x658] sm:$0xff]
    %v1087 = vld [vmem:[#allocation10 + $0x660] sm:$0xff]
    %v1088 = vld [vmem:[#allocation10 + $0x668] sm:$0xff]
    %v1089 = vld [vmem:[#allocation10 + $0x670] sm:$0xff]
    %v1090 = vld [vmem:[#allocation10 + $0x678] sm:$0xff]
    %v1091 = vld [vmem:[#allocation10 + $0x680] sm:$0xff]
    %v1092 = vld [vmem:[#allocation10 + $0x688] sm:$0xff]
    %v1093 = vld [vmem:[#allocation10 + $0x690] sm:$0xff]
    %v1094 = vld [vmem:[#allocation10 + $0x698] sm:$0xff]
    %v1095 = vld [vmem:[#allocation10 + $0x6a0] sm:$0xff]
    %v1096 = vld [vmem:[#allocation10 + $0x6a8] sm:$0xff]
    %v1097 = vld [vmem:[#allocation10 + $0x6b0] sm:$0xff]
    %v1098 = vld [vmem:[#allocation10 + $0x6b8] sm:$0xff]
    %v1099 = vld [vmem:[#allocation10 + $0x6c0] sm:$0xff]
    %v1100 = vld [vmem:[#allocation10 + $0x6c8] sm:$0xff]
    %v1101 = vld [vmem:[#allocation10 + $0x6d0] sm:$0xff]
    %v1102 = vld [vmem:[#allocation10 + $0x6d8] sm:$0xff]
    %v1103 = vld [vmem:[#allocation10 + $0x6e0] sm:$0xff]
    %v1104 = vld [vmem:[#allocation10 + $0x6e8] sm:$0xff]
    %v1105 = vld [vmem:[#allocation10 + $0x6f0] sm:$0xff]
    %v1106 = vld [vmem:[#allocation10 + $0x6f8] sm:$0xff]
    %v1107 = vld [vmem:[#allocation10 + $0x700] sm:$0xff]
    %v1108 = vld [vmem:[#allocation10 + $0x708] sm:$0xff]
    %v1109 = vld [vmem:[#allocation10 + $0x710] sm:$0xff]
    %v1110 = vld [vmem:[#allocation10 + $0x718] sm:$0xff]
    %v1111 = vld [vmem:[#allocation10 + $0x720] sm:$0xff]
    %v1112 = vld [vmem:[#allocation10 + $0x728] sm:$0xff]
    %v1113 = vld [vmem:[#allocation10 + $0x730] sm:$0xff]
    %v1114 = vld [vmem:[#allocation10 + $0x738] sm:$0xff]
    %v1115 = vld [vmem:[#allocation10 + $0x740] sm:$0xff]
    %v1116 = vld [vmem:[#allocation10 + $0x748] sm:$0xff]
    %v1117 = vld [vmem:[#allocation10 + $0x750] sm:$0xff]
    %v1118 = vld [vmem:[#allocation10 + $0x758] sm:$0xff]
    %v1119 = vld [vmem:[#allocation10 + $0x760] sm:$0xff]
    %v1120 = vld [vmem:[#allocation10 + $0x768] sm:$0xff]
    %v1121 = vld [vmem:[#allocation10 + $0x770] sm:$0xff]
    %v1122 = vld [vmem:[#allocation10 + $0x778] sm:$0xff]
    %v1123 = vld [vmem:[#allocation10 + $0x780] sm:$0xff]
    %v1124 = vld [vmem:[#allocation10 + $0x788] sm:$0xff]
    %v1125 = vld [vmem:[#allocation10 + $0x790] sm:$0xff]
    %v1126 = vld [vmem:[#allocation10 + $0x798] sm:$0xff]
    %v1127 = vld [vmem:[#allocation10 + $0x7a0] sm:$0xff]
    %v1128 = vld [vmem:[#allocation10 + $0x7a8] sm:$0xff]
    %v1129 = vld [vmem:[#allocation10 + $0x7b0] sm:$0xff]
    %v1130 = vld [vmem:[#allocation10 + $0x7b8] sm:$0xff]
    %v1131 = vld [vmem:[#allocation10 + $0x7c0] sm:$0xff]
    %v1132 = vld [vmem:[#allocation10 + $0x7c8] sm:$0xff]
    %v1133 = vld [vmem:[#allocation10 + $0x7d0] sm:$0xff]
    %v1134 = vld [vmem:[#allocation10 + $0x7d8] sm:$0xff]
    %v1135 = vld [vmem:[#allocation10 + $0x7e0] sm:$0xff]
    %v1136 = vld [vmem:[#allocation10 + $0x7e8] sm:$0xff]
    %v1137 = vld [vmem:[#allocation10 + $0x7f0] sm:$0xff]
    %v1138 = vld [vmem:[#allocation10 + $0x7f8] sm:$0xff]
    %v1139 = vld [vmem:[%s8] sm:$0xff]
    %v1141 = vlaneseq
    %v1142 = vshrl.u32 %v1141, 7
    %v1143 = vsub.s32 0, %v1142
    %v1144 = vrot.slane %v1139, %v1143
    %v1145 = vlaneseq
    %v1146 = vshrl.u32 %v1145, 7
    %v1147 = vsub.s32 1, %v1146
    %v1148 = vrot.slane %v1139, %v1147
    %v1149 = vlaneseq
    %v1150 = vshrl.u32 %v1149, 7
    %v1151 = vsub.s32 2, %v1150
    %v1152 = vrot.slane %v1139, %v1151
    %v1153 = vlaneseq
    %v1154 = vshrl.u32 %v1153, 7
    %v1155 = vsub.s32 3, %v1154
    %v1156 = vrot.slane %v1139, %v1155
    %v1157 = vlaneseq
    %v1158 = vshrl.u32 %v1157, 7
    %v1159 = vsub.s32 4, %v1158
    %v1160 = vrot.slane %v1139, %v1159
    %v1161 = vlaneseq
    %v1162 = vshrl.u32 %v1161, 7
    %v1163 = vsub.s32 5, %v1162
    %v1164 = vrot.slane %v1139, %v1163
    %v1165 = vlaneseq
    %v1166 = vshrl.u32 %v1165, 7
    %v1167 = vsub.s32 6, %v1166
    %v1168 = vrot.slane %v1139, %v1167
    %v1169 = vlaneseq
    %v1170 = vshrl.u32 %v1169, 7
    %v1171 = vsub.s32 7, %v1170
    %v1172 = vrot.slane %v1139, %v1171
    %v1437 = vunpack.c.l.b16 %v883
    %v1438 = vunpack.c.h.b16 %v883
    %v1439 = vunpack.c.l.b16 %v884
    %v1440 = vunpack.c.h.b16 %v884
    %v1441 = vunpack.c.l.b16 %v885
    %v1442 = vunpack.c.h.b16 %v885
    %v1443 = vunpack.c.l.b16 %v886
    %v1444 = vunpack.c.h.b16 %v886
    %v1445 = vunpack.c.l.b16 %v887
    %v1446 = vunpack.c.h.b16 %v887
    %v1447 = vunpack.c.l.b16 %v888
    %v1448 = vunpack.c.h.b16 %v888
    %v1449 = vunpack.c.l.b16 %v889
    %v1450 = vunpack.c.h.b16 %v889
    %v1451 = vunpack.c.l.b16 %v890
    %v1452 = vunpack.c.h.b16 %v890
    %v1453 = vunpack.c.l.b16 %v891
    %v1454 = vunpack.c.h.b16 %v891
    %v1455 = vunpack.c.l.b16 %v892
    %v1456 = vunpack.c.h.b16 %v892
    %v1457 = vunpack.c.l.b16 %v893
    %v1458 = vunpack.c.h.b16 %v893
    %v1459 = vunpack.c.l.b16 %v894
    %v1460 = vunpack.c.h.b16 %v894
    %v1461 = vunpack.c.l.b16 %v895
    %v1462 = vunpack.c.h.b16 %v895
    %v1463 = vunpack.c.l.b16 %v896
    %v1464 = vunpack.c.h.b16 %v896
    %v1465 = vunpack.c.l.b16 %v897
    %v1466 = vunpack.c.h.b16 %v897
    %v1467 = vunpack.c.l.b16 %v898
    %v1468 = vunpack.c.h.b16 %v898
    %v1469 = vunpack.c.l.b16 %v899
    %v1470 = vunpack.c.h.b16 %v899
    %v1471 = vunpack.c.l.b16 %v900
    %v1472 = vunpack.c.h.b16 %v900
    %v1473 = vunpack.c.l.b16 %v901
    %v1474 = vunpack.c.h.b16 %v901
    %v1475 = vunpack.c.l.b16 %v902
    %v1476 = vunpack.c.h.b16 %v902
    %v1477 = vunpack.c.l.b16 %v903
    %v1478 = vunpack.c.h.b16 %v903
    %v1479 = vunpack.c.l.b16 %v904
    %v1480 = vunpack.c.h.b16 %v904
    %v1481 = vunpack.c.l.b16 %v905
    %v1482 = vunpack.c.h.b16 %v905
    %v1483 = vunpack.c.l.b16 %v906
    %v1484 = vunpack.c.h.b16 %v906
    %v1485 = vunpack.c.l.b16 %v907
    %v1486 = vunpack.c.h.b16 %v907
    %v1487 = vunpack.c.l.b16 %v908
    %v1488 = vunpack.c.h.b16 %v908
    %v1489 = vunpack.c.l.b16 %v909
    %v1490 = vunpack.c.h.b16 %v909
    %v1491 = vunpack.c.l.b16 %v910
    %v1492 = vunpack.c.h.b16 %v910
    %v1493 = vunpack.c.l.b16 %v911
    %v1494 = vunpack.c.h.b16 %v911
    %v1495 = vunpack.c.l.b16 %v912
    %v1496 = vunpack.c.h.b16 %v912
    %v1497 = vunpack.c.l.b16 %v913
    %v1498 = vunpack.c.h.b16 %v913
    %v1499 = vunpack.c.l.b16 %v914
    %v1500 = vunpack.c.h.b16 %v914
    %v1501 = vunpack.c.l.b16 %v915
    %v1502 = vunpack.c.h.b16 %v915
    %v1503 = vunpack.c.l.b16 %v916
    %v1504 = vunpack.c.h.b16 %v916
    %v1505 = vunpack.c.l.b16 %v917
    %v1506 = vunpack.c.h.b16 %v917
    %v1507 = vunpack.c.l.b16 %v918
    %v1508 = vunpack.c.h.b16 %v918
    %v1509 = vunpack.c.l.b16 %v919
    %v1510 = vunpack.c.h.b16 %v919
    %v1511 = vunpack.c.l.b16 %v920
    %v1512 = vunpack.c.h.b16 %v920
    %v1513 = vunpack.c.l.b16 %v921
    %v1514 = vunpack.c.h.b16 %v921
    %v1515 = vunpack.c.l.b16 %v922
    %v1516 = vunpack.c.h.b16 %v922
    %v1517 = vunpack.c.l.b16 %v923
    %v1518 = vunpack.c.h.b16 %v923
    %v1519 = vunpack.c.l.b16 %v924
    %v1520 = vunpack.c.h.b16 %v924
    %v1521 = vunpack.c.l.b16 %v925
    %v1522 = vunpack.c.h.b16 %v925
    %v1523 = vunpack.c.l.b16 %v926
    %v1524 = vunpack.c.h.b16 %v926
    %v1525 = vunpack.c.l.b16 %v927
    %v1526 = vunpack.c.h.b16 %v927
    %v1527 = vunpack.c.l.b16 %v928
    %v1528 = vunpack.c.h.b16 %v928
    %v1529 = vunpack.c.l.b16 %v929
    %v1530 = vunpack.c.h.b16 %v929
    %v1531 = vunpack.c.l.b16 %v930
    %v1532 = vunpack.c.h.b16 %v930
    %v1533 = vunpack.c.l.b16 %v931
    %v1534 = vunpack.c.h.b16 %v931
    %v1535 = vunpack.c.l.b16 %v932
    %v1536 = vunpack.c.h.b16 %v932
    %v1537 = vunpack.c.l.b16 %v933
    %v1538 = vunpack.c.h.b16 %v933
    %v1539 = vunpack.c.l.b16 %v934
    %v1540 = vunpack.c.h.b16 %v934
    %v1541 = vunpack.c.l.b16 %v935
    %v1542 = vunpack.c.h.b16 %v935
    %v1543 = vunpack.c.l.b16 %v936
    %v1544 = vunpack.c.h.b16 %v936
    %v1545 = vunpack.c.l.b16 %v937
    %v1546 = vunpack.c.h.b16 %v937
    %v1547 = vunpack.c.l.b16 %v938
    %v1548 = vunpack.c.h.b16 %v938
    %v1549 = vunpack.c.l.b16 %v939
    %v1550 = vunpack.c.h.b16 %v939
    %v1551 = vunpack.c.l.b16 %v940
    %v1552 = vunpack.c.h.b16 %v940
    %v1553 = vunpack.c.l.b16 %v941
    %v1554 = vunpack.c.h.b16 %v941
    %v1555 = vunpack.c.l.b16 %v942
    %v1556 = vunpack.c.h.b16 %v942
    %v1557 = vunpack.c.l.b16 %v943
    %v1558 = vunpack.c.h.b16 %v943
    %v1559 = vunpack.c.l.b16 %v944
    %v1560 = vunpack.c.h.b16 %v944
    %v1561 = vunpack.c.l.b16 %v945
    %v1562 = vunpack.c.h.b16 %v945
    %v1563 = vunpack.c.l.b16 %v946
    %v1564 = vunpack.c.h.b16 %v946
    %v1565 = vunpack.c.l.b16 %v947
    %v1566 = vunpack.c.h.b16 %v947
    %v1567 = vunpack.c.l.b16 %v948
    %v1568 = vunpack.c.h.b16 %v948
    %v1569 = vunpack.c.l.b16 %v949
    %v1570 = vunpack.c.h.b16 %v949
    %v1571 = vunpack.c.l.b16 %v950
    %v1572 = vunpack.c.h.b16 %v950
    %v1573 = vunpack.c.l.b16 %v951
    %v1574 = vunpack.c.h.b16 %v951
    %v1575 = vunpack.c.l.b16 %v952
    %v1576 = vunpack.c.h.b16 %v952
    %v1577 = vunpack.c.l.b16 %v953
    %v1578 = vunpack.c.h.b16 %v953
    %v1579 = vunpack.c.l.b16 %v954
    %v1580 = vunpack.c.h.b16 %v954
    %v1581 = vunpack.c.l.b16 %v955
    %v1582 = vunpack.c.h.b16 %v955
    %v1583 = vunpack.c.l.b16 %v956
    %v1584 = vunpack.c.h.b16 %v956
    %v1585 = vunpack.c.l.b16 %v957
    %v1586 = vunpack.c.h.b16 %v957
    %v1587 = vunpack.c.l.b16 %v958
    %v1588 = vunpack.c.h.b16 %v958
    %v1589 = vunpack.c.l.b16 %v959
    %v1590 = vunpack.c.h.b16 %v959
    %v1591 = vunpack.c.l.b16 %v960
    %v1592 = vunpack.c.h.b16 %v960
    %v1593 = vunpack.c.l.b16 %v961
    %v1594 = vunpack.c.h.b16 %v961
    %v1595 = vunpack.c.l.b16 %v962
    %v1596 = vunpack.c.h.b16 %v962
    %v1597 = vunpack.c.l.b16 %v963
    %v1598 = vunpack.c.h.b16 %v963
    %v1599 = vunpack.c.l.b16 %v964
    %v1600 = vunpack.c.h.b16 %v964
    %v1601 = vunpack.c.l.b16 %v965
    %v1602 = vunpack.c.h.b16 %v965
    %v1603 = vunpack.c.l.b16 %v966
    %v1604 = vunpack.c.h.b16 %v966
    %v1605 = vunpack.c.l.b16 %v967
    %v1606 = vunpack.c.h.b16 %v967
    %v1607 = vunpack.c.l.b16 %v968
    %v1608 = vunpack.c.h.b16 %v968
    %v1609 = vunpack.c.l.b16 %v969
    %v1610 = vunpack.c.h.b16 %v969
    %v1611 = vunpack.c.l.b16 %v970
    %v1612 = vunpack.c.h.b16 %v970
    %v1613 = vunpack.c.l.b16 %v971
    %v1614 = vunpack.c.h.b16 %v971
    %v1615 = vunpack.c.l.b16 %v972
    %v1616 = vunpack.c.h.b16 %v972
    %v1617 = vunpack.c.l.b16 %v973
    %v1618 = vunpack.c.h.b16 %v973
    %v1619 = vunpack.c.l.b16 %v974
    %v1620 = vunpack.c.h.b16 %v974
    %v1621 = vunpack.c.l.b16 %v975
    %v1622 = vunpack.c.h.b16 %v975
    %v1623 = vunpack.c.l.b16 %v976
    %v1624 = vunpack.c.h.b16 %v976
    %v1625 = vunpack.c.l.b16 %v977
    %v1626 = vunpack.c.h.b16 %v977
    %v1627 = vunpack.c.l.b16 %v978
    %v1628 = vunpack.c.h.b16 %v978
    %v1629 = vunpack.c.l.b16 %v979
    %v1630 = vunpack.c.h.b16 %v979
    %v1631 = vunpack.c.l.b16 %v980
    %v1632 = vunpack.c.h.b16 %v980
    %v1633 = vunpack.c.l.b16 %v981
    %v1634 = vunpack.c.h.b16 %v981
    %v1635 = vunpack.c.l.b16 %v982
    %v1636 = vunpack.c.h.b16 %v982
    %v1637 = vunpack.c.l.b16 %v983
    %v1638 = vunpack.c.h.b16 %v983
    %v1639 = vunpack.c.l.b16 %v984
    %v1640 = vunpack.c.h.b16 %v984
    %v1641 = vunpack.c.l.b16 %v985
    %v1642 = vunpack.c.h.b16 %v985
    %v1643 = vunpack.c.l.b16 %v986
    %v1644 = vunpack.c.h.b16 %v986
    %v1645 = vunpack.c.l.b16 %v987
    %v1646 = vunpack.c.h.b16 %v987
    %v1647 = vunpack.c.l.b16 %v988
    %v1648 = vunpack.c.h.b16 %v988
    %v1649 = vunpack.c.l.b16 %v989
    %v1650 = vunpack.c.h.b16 %v989
    %v1651 = vunpack.c.l.b16 %v990
    %v1652 = vunpack.c.h.b16 %v990
    %v1653 = vunpack.c.l.b16 %v991
    %v1654 = vunpack.c.h.b16 %v991
    %v1655 = vunpack.c.l.b16 %v992
    %v1656 = vunpack.c.h.b16 %v992
    %v1657 = vunpack.c.l.b16 %v993
    %v1658 = vunpack.c.h.b16 %v993
    %v1659 = vunpack.c.l.b16 %v994
    %v1660 = vunpack.c.h.b16 %v994
    %v1661 = vunpack.c.l.b16 %v995
    %v1662 = vunpack.c.h.b16 %v995
    %v1663 = vunpack.c.l.b16 %v996
    %v1664 = vunpack.c.h.b16 %v996
    %v1665 = vunpack.c.l.b16 %v997
    %v1666 = vunpack.c.h.b16 %v997
    %v1667 = vunpack.c.l.b16 %v998
    %v1668 = vunpack.c.h.b16 %v998
    %v1669 = vunpack.c.l.b16 %v999
    %v1670 = vunpack.c.h.b16 %v999
    %v1671 = vunpack.c.l.b16 %v1000
    %v1672 = vunpack.c.h.b16 %v1000
    %v1673 = vunpack.c.l.b16 %v1001
    %v1674 = vunpack.c.h.b16 %v1001
    %v1675 = vunpack.c.l.b16 %v1002
    %v1676 = vunpack.c.h.b16 %v1002
    %v1677 = vunpack.c.l.b16 %v1003
    %v1678 = vunpack.c.h.b16 %v1003
    %v1679 = vunpack.c.l.b16 %v1004
    %v1680 = vunpack.c.h.b16 %v1004
    %v1681 = vunpack.c.l.b16 %v1005
    %v1682 = vunpack.c.h.b16 %v1005
    %v1683 = vunpack.c.l.b16 %v1006
    %v1684 = vunpack.c.h.b16 %v1006
    %v1685 = vunpack.c.l.b16 %v1007
    %v1686 = vunpack.c.h.b16 %v1007
    %v1687 = vunpack.c.l.b16 %v1008
    %v1688 = vunpack.c.h.b16 %v1008
    %v1689 = vunpack.c.l.b16 %v1009
    %v1690 = vunpack.c.h.b16 %v1009
    %v1691 = vunpack.c.l.b16 %v1010
    %v1692 = vunpack.c.h.b16 %v1010
    %v1693 = vunpack.c.l.b16 %v1011
    %v1694 = vunpack.c.h.b16 %v1011
    %v1695 = vunpack.c.l.b16 %v1012
    %v1696 = vunpack.c.h.b16 %v1012
    %v1697 = vunpack.c.l.b16 %v1013
    %v1698 = vunpack.c.h.b16 %v1013
    %v1699 = vunpack.c.l.b16 %v1014
    %v1700 = vunpack.c.h.b16 %v1014
    %v1701 = vunpack.c.l.b16 %v1015
    %v1702 = vunpack.c.h.b16 %v1015
    %v1703 = vunpack.c.l.b16 %v1016
    %v1704 = vunpack.c.h.b16 %v1016
    %v1705 = vunpack.c.l.b16 %v1017
    %v1706 = vunpack.c.h.b16 %v1017
    %v1707 = vunpack.c.l.b16 %v1018
    %v1708 = vunpack.c.h.b16 %v1018
    %v1709 = vunpack.c.l.b16 %v1019
    %v1710 = vunpack.c.h.b16 %v1019
    %v1711 = vunpack.c.l.b16 %v1020
    %v1712 = vunpack.c.h.b16 %v1020
    %v1713 = vunpack.c.l.b16 %v1021
    %v1714 = vunpack.c.h.b16 %v1021
    %v1715 = vunpack.c.l.b16 %v1022
    %v1716 = vunpack.c.h.b16 %v1022
    %v1717 = vunpack.c.l.b16 %v1023
    %v1718 = vunpack.c.h.b16 %v1023
    %v1719 = vunpack.c.l.b16 %v1024
    %v1720 = vunpack.c.h.b16 %v1024
    %v1721 = vunpack.c.l.b16 %v1025
    %v1722 = vunpack.c.h.b16 %v1025
    %v1723 = vunpack.c.l.b16 %v1026
    %v1724 = vunpack.c.h.b16 %v1026
    %v1725 = vunpack.c.l.b16 %v1027
    %v1726 = vunpack.c.h.b16 %v1027
    %v1727 = vunpack.c.l.b16 %v1028
    %v1728 = vunpack.c.h.b16 %v1028
    %v1729 = vunpack.c.l.b16 %v1029
    %v1730 = vunpack.c.h.b16 %v1029
    %v1731 = vunpack.c.l.b16 %v1030
    %v1732 = vunpack.c.h.b16 %v1030
    %v1733 = vunpack.c.l.b16 %v1031
    %v1734 = vunpack.c.h.b16 %v1031
    %v1735 = vunpack.c.l.b16 %v1032
    %v1736 = vunpack.c.h.b16 %v1032
    %v1737 = vunpack.c.l.b16 %v1033
    %v1738 = vunpack.c.h.b16 %v1033
    %v1739 = vunpack.c.l.b16 %v1034
    %v1740 = vunpack.c.h.b16 %v1034
    %v1741 = vunpack.c.l.b16 %v1035
    %v1742 = vunpack.c.h.b16 %v1035
    %v1743 = vunpack.c.l.b16 %v1036
    %v1744 = vunpack.c.h.b16 %v1036
    %v1745 = vunpack.c.l.b16 %v1037
    %v1746 = vunpack.c.h.b16 %v1037
    %v1747 = vunpack.c.l.b16 %v1038
    %v1748 = vunpack.c.h.b16 %v1038
    %v1749 = vunpack.c.l.b16 %v1039
    %v1750 = vunpack.c.h.b16 %v1039
    %v1751 = vunpack.c.l.b16 %v1040
    %v1752 = vunpack.c.h.b16 %v1040
    %v1753 = vunpack.c.l.b16 %v1041
    %v1754 = vunpack.c.h.b16 %v1041
    %v1755 = vunpack.c.l.b16 %v1042
    %v1756 = vunpack.c.h.b16 %v1042
    %v1757 = vunpack.c.l.b16 %v1043
    %v1758 = vunpack.c.h.b16 %v1043
    %v1759 = vunpack.c.l.b16 %v1044
    %v1760 = vunpack.c.h.b16 %v1044
    %v1761 = vunpack.c.l.b16 %v1045
    %v1762 = vunpack.c.h.b16 %v1045
    %v1763 = vunpack.c.l.b16 %v1046
    %v1764 = vunpack.c.h.b16 %v1046
    %v1765 = vunpack.c.l.b16 %v1047
    %v1766 = vunpack.c.h.b16 %v1047
    %v1767 = vunpack.c.l.b16 %v1048
    %v1768 = vunpack.c.h.b16 %v1048
    %v1769 = vunpack.c.l.b16 %v1049
    %v1770 = vunpack.c.h.b16 %v1049
    %v1771 = vunpack.c.l.b16 %v1050
    %v1772 = vunpack.c.h.b16 %v1050
    %v1773 = vunpack.c.l.b16 %v1051
    %v1774 = vunpack.c.h.b16 %v1051
    %v1775 = vunpack.c.l.b16 %v1052
    %v1776 = vunpack.c.h.b16 %v1052
    %v1777 = vunpack.c.l.b16 %v1053
    %v1778 = vunpack.c.h.b16 %v1053
    %v1779 = vunpack.c.l.b16 %v1054
    %v1780 = vunpack.c.h.b16 %v1054
    %v1781 = vunpack.c.l.b16 %v1055
    %v1782 = vunpack.c.h.b16 %v1055
    %v1783 = vunpack.c.l.b16 %v1056
    %v1784 = vunpack.c.h.b16 %v1056
    %v1785 = vunpack.c.l.b16 %v1057
    %v1786 = vunpack.c.h.b16 %v1057
    %v1787 = vunpack.c.l.b16 %v1058
    %v1788 = vunpack.c.h.b16 %v1058
    %v1789 = vunpack.c.l.b16 %v1059
    %v1790 = vunpack.c.h.b16 %v1059
    %v1791 = vunpack.c.l.b16 %v1060
    %v1792 = vunpack.c.h.b16 %v1060
    %v1793 = vunpack.c.l.b16 %v1061
    %v1794 = vunpack.c.h.b16 %v1061
    %v1795 = vunpack.c.l.b16 %v1062
    %v1796 = vunpack.c.h.b16 %v1062
    %v1797 = vunpack.c.l.b16 %v1063
    %v1798 = vunpack.c.h.b16 %v1063
    %v1799 = vunpack.c.l.b16 %v1064
    %v1800 = vunpack.c.h.b16 %v1064
    %v1801 = vunpack.c.l.b16 %v1065
    %v1802 = vunpack.c.h.b16 %v1065
    %v1803 = vunpack.c.l.b16 %v1066
    %v1804 = vunpack.c.h.b16 %v1066
    %v1805 = vunpack.c.l.b16 %v1067
    %v1806 = vunpack.c.h.b16 %v1067
    %v1807 = vunpack.c.l.b16 %v1068
    %v1808 = vunpack.c.h.b16 %v1068
    %v1809 = vunpack.c.l.b16 %v1069
    %v1810 = vunpack.c.h.b16 %v1069
    %v1811 = vunpack.c.l.b16 %v1070
    %v1812 = vunpack.c.h.b16 %v1070
    %v1813 = vunpack.c.l.b16 %v1071
    %v1814 = vunpack.c.h.b16 %v1071
    %v1815 = vunpack.c.l.b16 %v1072
    %v1816 = vunpack.c.h.b16 %v1072
    %v1817 = vunpack.c.l.b16 %v1073
    %v1818 = vunpack.c.h.b16 %v1073
    %v1819 = vunpack.c.l.b16 %v1074
    %v1820 = vunpack.c.h.b16 %v1074
    %v1821 = vunpack.c.l.b16 %v1075
    %v1822 = vunpack.c.h.b16 %v1075
    %v1823 = vunpack.c.l.b16 %v1076
    %v1824 = vunpack.c.h.b16 %v1076
    %v1825 = vunpack.c.l.b16 %v1077
    %v1826 = vunpack.c.h.b16 %v1077
    %v1827 = vunpack.c.l.b16 %v1078
    %v1828 = vunpack.c.h.b16 %v1078
    %v1829 = vunpack.c.l.b16 %v1079
    %v1830 = vunpack.c.h.b16 %v1079
    %v1831 = vunpack.c.l.b16 %v1080
    %v1832 = vunpack.c.h.b16 %v1080
    %v1833 = vunpack.c.l.b16 %v1081
    %v1834 = vunpack.c.h.b16 %v1081
    %v1835 = vunpack.c.l.b16 %v1082
    %v1836 = vunpack.c.h.b16 %v1082
    %v1837 = vunpack.c.l.b16 %v1083
    %v1838 = vunpack.c.h.b16 %v1083
    %v1839 = vunpack.c.l.b16 %v1084
    %v1840 = vunpack.c.h.b16 %v1084
    %v1841 = vunpack.c.l.b16 %v1085
    %v1842 = vunpack.c.h.b16 %v1085
    %v1843 = vunpack.c.l.b16 %v1086
    %v1844 = vunpack.c.h.b16 %v1086
    %v1845 = vunpack.c.l.b16 %v1087
    %v1846 = vunpack.c.h.b16 %v1087
    %v1847 = vunpack.c.l.b16 %v1088
    %v1848 = vunpack.c.h.b16 %v1088
    %v1849 = vunpack.c.l.b16 %v1089
    %v1850 = vunpack.c.h.b16 %v1089
    %v1851 = vunpack.c.l.b16 %v1090
    %v1852 = vunpack.c.h.b16 %v1090
    %v1853 = vunpack.c.l.b16 %v1091
    %v1854 = vunpack.c.h.b16 %v1091
    %v1855 = vunpack.c.l.b16 %v1092
    %v1856 = vunpack.c.h.b16 %v1092
    %v1857 = vunpack.c.l.b16 %v1093
    %v1858 = vunpack.c.h.b16 %v1093
    %v1859 = vunpack.c.l.b16 %v1094
    %v1860 = vunpack.c.h.b16 %v1094
    %v1861 = vunpack.c.l.b16 %v1095
    %v1862 = vunpack.c.h.b16 %v1095
    %v1863 = vunpack.c.l.b16 %v1096
    %v1864 = vunpack.c.h.b16 %v1096
    %v1865 = vunpack.c.l.b16 %v1097
    %v1866 = vunpack.c.h.b16 %v1097
    %v1867 = vunpack.c.l.b16 %v1098
    %v1868 = vunpack.c.h.b16 %v1098
    %v1869 = vunpack.c.l.b16 %v1099
    %v1870 = vunpack.c.h.b16 %v1099
    %v1871 = vunpack.c.l.b16 %v1100
    %v1872 = vunpack.c.h.b16 %v1100
    %v1873 = vunpack.c.l.b16 %v1101
    %v1874 = vunpack.c.h.b16 %v1101
    %v1875 = vunpack.c.l.b16 %v1102
    %v1876 = vunpack.c.h.b16 %v1102
    %v1877 = vunpack.c.l.b16 %v1103
    %v1878 = vunpack.c.h.b16 %v1103
    %v1879 = vunpack.c.l.b16 %v1104
    %v1880 = vunpack.c.h.b16 %v1104
    %v1881 = vunpack.c.l.b16 %v1105
    %v1882 = vunpack.c.h.b16 %v1105
    %v1883 = vunpack.c.l.b16 %v1106
    %v1884 = vunpack.c.h.b16 %v1106
    %v1885 = vunpack.c.l.b16 %v1107
    %v1886 = vunpack.c.h.b16 %v1107
    %v1887 = vunpack.c.l.b16 %v1108
    %v1888 = vunpack.c.h.b16 %v1108
    %v1889 = vunpack.c.l.b16 %v1109
    %v1890 = vunpack.c.h.b16 %v1109
    %v1891 = vunpack.c.l.b16 %v1110
    %v1892 = vunpack.c.h.b16 %v1110
    %v1893 = vunpack.c.l.b16 %v1111
    %v1894 = vunpack.c.h.b16 %v1111
    %v1895 = vunpack.c.l.b16 %v1112
    %v1896 = vunpack.c.h.b16 %v1112
    %v1897 = vunpack.c.l.b16 %v1113
    %v1898 = vunpack.c.h.b16 %v1113
    %v1899 = vunpack.c.l.b16 %v1114
    %v1900 = vunpack.c.h.b16 %v1114
    %v1901 = vunpack.c.l.b16 %v1115
    %v1902 = vunpack.c.h.b16 %v1115
    %v1903 = vunpack.c.l.b16 %v1116
    %v1904 = vunpack.c.h.b16 %v1116
    %v1905 = vunpack.c.l.b16 %v1117
    %v1906 = vunpack.c.h.b16 %v1117
    %v1907 = vunpack.c.l.b16 %v1118
    %v1908 = vunpack.c.h.b16 %v1118
    %v1909 = vunpack.c.l.b16 %v1119
    %v1910 = vunpack.c.h.b16 %v1119
    %v1911 = vunpack.c.l.b16 %v1120
    %v1912 = vunpack.c.h.b16 %v1120
    %v1913 = vunpack.c.l.b16 %v1121
    %v1914 = vunpack.c.h.b16 %v1121
    %v1915 = vunpack.c.l.b16 %v1122
    %v1916 = vunpack.c.h.b16 %v1122
    %v1917 = vunpack.c.l.b16 %v1123
    %v1918 = vunpack.c.h.b16 %v1123
    %v1919 = vunpack.c.l.b16 %v1124
    %v1920 = vunpack.c.h.b16 %v1124
    %v1921 = vunpack.c.l.b16 %v1125
    %v1922 = vunpack.c.h.b16 %v1125
    %v1923 = vunpack.c.l.b16 %v1126
    %v1924 = vunpack.c.h.b16 %v1126
    %v1925 = vunpack.c.l.b16 %v1127
    %v1926 = vunpack.c.h.b16 %v1127
    %v1927 = vunpack.c.l.b16 %v1128
    %v1928 = vunpack.c.h.b16 %v1128
    %v1929 = vunpack.c.l.b16 %v1129
    %v1930 = vunpack.c.h.b16 %v1129
    %v1931 = vunpack.c.l.b16 %v1130
    %v1932 = vunpack.c.h.b16 %v1130
    %v1933 = vunpack.c.l.b16 %v1131
    %v1934 = vunpack.c.h.b16 %v1131
    %v1935 = vunpack.c.l.b16 %v1132
    %v1936 = vunpack.c.h.b16 %v1132
    %v1937 = vunpack.c.l.b16 %v1133
    %v1938 = vunpack.c.h.b16 %v1133
    %v1939 = vunpack.c.l.b16 %v1134
    %v1940 = vunpack.c.h.b16 %v1134
    %v1941 = vunpack.c.l.b16 %v1135
    %v1942 = vunpack.c.h.b16 %v1135
    %v1943 = vunpack.c.l.b16 %v1136
    %v1944 = vunpack.c.h.b16 %v1136
    %v1945 = vunpack.c.l.b16 %v1137
    %v1946 = vunpack.c.h.b16 %v1137
    %v1947 = vunpack.c.l.b16 %v1138
    %v1948 = vunpack.c.h.b16 %v1138
    %v1949 = vpack.c.b16 %v1445, %v1437
    %v1950 = vpack.c.b16 %v1446, %v1438
    %v1951 = vpack.c.b16 %v1447, %v1439
    %v1952 = vpack.c.b16 %v1448, %v1440
    %v1953 = vpack.c.b16 %v1449, %v1441
    %v1954 = vpack.c.b16 %v1450, %v1442
    %v1955 = vpack.c.b16 %v1451, %v1443
    %v1956 = vpack.c.b16 %v1452, %v1444
    %v1957 = vpack.c.b16 %v1461, %v1453
    %v1958 = vpack.c.b16 %v1462, %v1454
    %v1959 = vpack.c.b16 %v1463, %v1455
    %v1960 = vpack.c.b16 %v1464, %v1456
    %v1961 = vpack.c.b16 %v1465, %v1457
    %v1962 = vpack.c.b16 %v1466, %v1458
    %v1963 = vpack.c.b16 %v1467, %v1459
    %v1964 = vpack.c.b16 %v1468, %v1460
    %v1965 = vpack.c.b16 %v1477, %v1469
    %v1966 = vpack.c.b16 %v1478, %v1470
    %v1967 = vpack.c.b16 %v1479, %v1471
    %v1968 = vpack.c.b16 %v1480, %v1472
    %v1969 = vpack.c.b16 %v1481, %v1473
    %v1970 = vpack.c.b16 %v1482, %v1474
    %v1971 = vpack.c.b16 %v1483, %v1475
    %v1972 = vpack.c.b16 %v1484, %v1476
    %v1973 = vpack.c.b16 %v1493, %v1485
    %v1974 = vpack.c.b16 %v1494, %v1486
    %v1975 = vpack.c.b16 %v1495, %v1487
    %v1976 = vpack.c.b16 %v1496, %v1488
    %v1977 = vpack.c.b16 %v1497, %v1489
    %v1978 = vpack.c.b16 %v1498, %v1490
    %v1979 = vpack.c.b16 %v1499, %v1491
    %v1980 = vpack.c.b16 %v1500, %v1492
    %v1981 = vpack.c.b16 %v1509, %v1501
    %v1982 = vpack.c.b16 %v1510, %v1502
    %v1983 = vpack.c.b16 %v1511, %v1503
    %v1984 = vpack.c.b16 %v1512, %v1504
    %v1985 = vpack.c.b16 %v1513, %v1505
    %v1986 = vpack.c.b16 %v1514, %v1506
    %v1987 = vpack.c.b16 %v1515, %v1507
    %v1988 = vpack.c.b16 %v1516, %v1508
    %v1989 = vpack.c.b16 %v1525, %v1517
    %v1990 = vpack.c.b16 %v1526, %v1518
    %v1991 = vpack.c.b16 %v1527, %v1519
    %v1992 = vpack.c.b16 %v1528, %v1520
    %v1993 = vpack.c.b16 %v1529, %v1521
    %v1994 = vpack.c.b16 %v1530, %v1522
    %v1995 = vpack.c.b16 %v1531, %v1523
    %v1996 = vpack.c.b16 %v1532, %v1524
    %v1997 = vpack.c.b16 %v1541, %v1533
    %v1998 = vpack.c.b16 %v1542, %v1534
    %v1999 = vpack.c.b16 %v1543, %v1535
    %v2000 = vpack.c.b16 %v1544, %v1536
    %v2001 = vpack.c.b16 %v1545, %v1537
    %v2002 = vpack.c.b16 %v1546, %v1538
    %v2003 = vpack.c.b16 %v1547, %v1539
    %v2004 = vpack.c.b16 %v1548, %v1540
    %v2005 = vpack.c.b16 %v1557, %v1549
    %v2006 = vpack.c.b16 %v1558, %v1550
    %v2007 = vpack.c.b16 %v1559, %v1551
    %v2008 = vpack.c.b16 %v1560, %v1552
    %v2009 = vpack.c.b16 %v1561, %v1553
    %v2010 = vpack.c.b16 %v1562, %v1554
    %v2011 = vpack.c.b16 %v1563, %v1555
    %v2012 = vpack.c.b16 %v1564, %v1556
    %v2013 = vpack.c.b16 %v1573, %v1565
    %v2014 = vpack.c.b16 %v1574, %v1566
    %v2015 = vpack.c.b16 %v1575, %v1567
    %v2016 = vpack.c.b16 %v1576, %v1568
    %v2017 = vpack.c.b16 %v1577, %v1569
    %v2018 = vpack.c.b16 %v1578, %v1570
    %v2019 = vpack.c.b16 %v1579, %v1571
    %v2020 = vpack.c.b16 %v1580, %v1572
    %v2021 = vpack.c.b16 %v1589, %v1581
    %v2022 = vpack.c.b16 %v1590, %v1582
    %v2023 = vpack.c.b16 %v1591, %v1583
    %v2024 = vpack.c.b16 %v1592, %v1584
    %v2025 = vpack.c.b16 %v1593, %v1585
    %v2026 = vpack.c.b16 %v1594, %v1586
    %v2027 = vpack.c.b16 %v1595, %v1587
    %v2028 = vpack.c.b16 %v1596, %v1588
    %v2029 = vpack.c.b16 %v1605, %v1597
    %v2030 = vpack.c.b16 %v1606, %v1598
    %v2031 = vpack.c.b16 %v1607, %v1599
    %v2032 = vpack.c.b16 %v1608, %v1600
    %v2033 = vpack.c.b16 %v1609, %v1601
    %v2034 = vpack.c.b16 %v1610, %v1602
    %v2035 = vpack.c.b16 %v1611, %v1603
    %v2036 = vpack.c.b16 %v1612, %v1604
    %v2037 = vpack.c.b16 %v1621, %v1613
    %v2038 = vpack.c.b16 %v1622, %v1614
    %v2039 = vpack.c.b16 %v1623, %v1615
    %v2040 = vpack.c.b16 %v1624, %v1616
    %v2041 = vpack.c.b16 %v1625, %v1617
    %v2042 = vpack.c.b16 %v1626, %v1618
    %v2043 = vpack.c.b16 %v1627, %v1619
    %v2044 = vpack.c.b16 %v1628, %v1620
    %v2045 = vpack.c.b16 %v1637, %v1629
    %v2046 = vpack.c.b16 %v1638, %v1630
    %v2047 = vpack.c.b16 %v1639, %v1631
    %v2048 = vpack.c.b16 %v1640, %v1632
    %v2049 = vpack.c.b16 %v1641, %v1633
    %v2050 = vpack.c.b16 %v1642, %v1634
    %v2051 = vpack.c.b16 %v1643, %v1635
    %v2052 = vpack.c.b16 %v1644, %v1636
    %v2053 = vpack.c.b16 %v1653, %v1645
    %v2054 = vpack.c.b16 %v1654, %v1646
    %v2055 = vpack.c.b16 %v1655, %v1647
    %v2056 = vpack.c.b16 %v1656, %v1648
    %v2057 = vpack.c.b16 %v1657, %v1649
    %v2058 = vpack.c.b16 %v1658, %v1650
    %v2059 = vpack.c.b16 %v1659, %v1651
    %v2060 = vpack.c.b16 %v1660, %v1652
    %v2061 = vpack.c.b16 %v1669, %v1661
    %v2062 = vpack.c.b16 %v1670, %v1662
    %v2063 = vpack.c.b16 %v1671, %v1663
    %v2064 = vpack.c.b16 %v1672, %v1664
    %v2065 = vpack.c.b16 %v1673, %v1665
    %v2066 = vpack.c.b16 %v1674, %v1666
    %v2067 = vpack.c.b16 %v1675, %v1667
    %v2068 = vpack.c.b16 %v1676, %v1668
    %v2069 = vpack.c.b16 %v1685, %v1677
    %v2070 = vpack.c.b16 %v1686, %v1678
    %v2071 = vpack.c.b16 %v1687, %v1679
    %v2072 = vpack.c.b16 %v1688, %v1680
    %v2073 = vpack.c.b16 %v1689, %v1681
    %v2074 = vpack.c.b16 %v1690, %v1682
    %v2075 = vpack.c.b16 %v1691, %v1683
    %v2076 = vpack.c.b16 %v1692, %v1684
    %v2077 = vpack.c.b16 %v1701, %v1693
    %v2078 = vpack.c.b16 %v1702, %v1694
    %v2079 = vpack.c.b16 %v1703, %v1695
    %v2080 = vpack.c.b16 %v1704, %v1696
    %v2081 = vpack.c.b16 %v1705, %v1697
    %v2082 = vpack.c.b16 %v1706, %v1698
    %v2083 = vpack.c.b16 %v1707, %v1699
    %v2084 = vpack.c.b16 %v1708, %v1700
    %v2085 = vpack.c.b16 %v1717, %v1709
    %v2086 = vpack.c.b16 %v1718, %v1710
    %v2087 = vpack.c.b16 %v1719, %v1711
    %v2088 = vpack.c.b16 %v1720, %v1712
    %v2089 = vpack.c.b16 %v1721, %v1713
    %v2090 = vpack.c.b16 %v1722, %v1714
    %v2091 = vpack.c.b16 %v1723, %v1715
    %v2092 = vpack.c.b16 %v1724, %v1716
    %v2093 = vpack.c.b16 %v1733, %v1725
    %v2094 = vpack.c.b16 %v1734, %v1726
    %v2095 = vpack.c.b16 %v1735, %v1727
    %v2096 = vpack.c.b16 %v1736, %v1728
    %v2097 = vpack.c.b16 %v1737, %v1729
    %v2098 = vpack.c.b16 %v1738, %v1730
    %v2099 = vpack.c.b16 %v1739, %v1731
    %v2100 = vpack.c.b16 %v1740, %v1732
    %v2101 = vpack.c.b16 %v1749, %v1741
    %v2102 = vpack.c.b16 %v1750, %v1742
    %v2103 = vpack.c.b16 %v1751, %v1743
    %v2104 = vpack.c.b16 %v1752, %v1744
    %v2105 = vpack.c.b16 %v1753, %v1745
    %v2106 = vpack.c.b16 %v1754, %v1746
    %v2107 = vpack.c.b16 %v1755, %v1747
    %v2108 = vpack.c.b16 %v1756, %v1748
    %v2109 = vpack.c.b16 %v1765, %v1757
    %v2110 = vpack.c.b16 %v1766, %v1758
    %v2111 = vpack.c.b16 %v1767, %v1759
    %v2112 = vpack.c.b16 %v1768, %v1760
    %v2113 = vpack.c.b16 %v1769, %v1761
    %v2114 = vpack.c.b16 %v1770, %v1762
    %v2115 = vpack.c.b16 %v1771, %v1763
    %v2116 = vpack.c.b16 %v1772, %v1764
    %v2117 = vpack.c.b16 %v1781, %v1773
    %v2118 = vpack.c.b16 %v1782, %v1774
    %v2119 = vpack.c.b16 %v1783, %v1775
    %v2120 = vpack.c.b16 %v1784, %v1776
    %v2121 = vpack.c.b16 %v1785, %v1777
    %v2122 = vpack.c.b16 %v1786, %v1778
    %v2123 = vpack.c.b16 %v1787, %v1779
    %v2124 = vpack.c.b16 %v1788, %v1780
    %v2125 = vpack.c.b16 %v1797, %v1789
    %v2126 = vpack.c.b16 %v1798, %v1790
    %v2127 = vpack.c.b16 %v1799, %v1791
    %v2128 = vpack.c.b16 %v1800, %v1792
    %v2129 = vpack.c.b16 %v1801, %v1793
    %v2130 = vpack.c.b16 %v1802, %v1794
    %v2131 = vpack.c.b16 %v1803, %v1795
    %v2132 = vpack.c.b16 %v1804, %v1796
    %v2133 = vpack.c.b16 %v1813, %v1805
    %v2134 = vpack.c.b16 %v1814, %v1806
    %v2135 = vpack.c.b16 %v1815, %v1807
    %v2136 = vpack.c.b16 %v1816, %v1808
    %v2137 = vpack.c.b16 %v1817, %v1809
    %v2138 = vpack.c.b16 %v1818, %v1810
    %v2139 = vpack.c.b16 %v1819, %v1811
    %v2140 = vpack.c.b16 %v1820, %v1812
    %v2141 = vpack.c.b16 %v1829, %v1821
    %v2142 = vpack.c.b16 %v1830, %v1822
    %v2143 = vpack.c.b16 %v1831, %v1823
    %v2144 = vpack.c.b16 %v1832, %v1824
    %v2145 = vpack.c.b16 %v1833, %v1825
    %v2146 = vpack.c.b16 %v1834, %v1826
    %v2147 = vpack.c.b16 %v1835, %v1827
    %v2148 = vpack.c.b16 %v1836, %v1828
    %v2149 = vpack.c.b16 %v1845, %v1837
    %v2150 = vpack.c.b16 %v1846, %v1838
    %v2151 = vpack.c.b16 %v1847, %v1839
    %v2152 = vpack.c.b16 %v1848, %v1840
    %v2153 = vpack.c.b16 %v1849, %v1841
    %v2154 = vpack.c.b16 %v1850, %v1842
    %v2155 = vpack.c.b16 %v1851, %v1843
    %v2156 = vpack.c.b16 %v1852, %v1844
    %v2157 = vpack.c.b16 %v1861, %v1853
    %v2158 = vpack.c.b16 %v1862, %v1854
    %v2159 = vpack.c.b16 %v1863, %v1855
    %v2160 = vpack.c.b16 %v1864, %v1856
    %v2161 = vpack.c.b16 %v1865, %v1857
    %v2162 = vpack.c.b16 %v1866, %v1858
    %v2163 = vpack.c.b16 %v1867, %v1859
    %v2164 = vpack.c.b16 %v1868, %v1860
    %v2165 = vpack.c.b16 %v1877, %v1869
    %v2166 = vpack.c.b16 %v1878, %v1870
    %v2167 = vpack.c.b16 %v1879, %v1871
    %v2168 = vpack.c.b16 %v1880, %v1872
    %v2169 = vpack.c.b16 %v1881, %v1873
    %v2170 = vpack.c.b16 %v1882, %v1874
    %v2171 = vpack.c.b16 %v1883, %v1875
    %v2172 = vpack.c.b16 %v1884, %v1876
    %v2173 = vpack.c.b16 %v1893, %v1885
    %v2174 = vpack.c.b16 %v1894, %v1886
    %v2175 = vpack.c.b16 %v1895, %v1887
    %v2176 = vpack.c.b16 %v1896, %v1888
    %v2177 = vpack.c.b16 %v1897, %v1889
    %v2178 = vpack.c.b16 %v1898, %v1890
    %v2179 = vpack.c.b16 %v1899, %v1891
    %v2180 = vpack.c.b16 %v1900, %v1892
    %v2181 = vpack.c.b16 %v1909, %v1901
    %v2182 = vpack.c.b16 %v1910, %v1902
    %v2183 = vpack.c.b16 %v1911, %v1903
    %v2184 = vpack.c.b16 %v1912, %v1904
    %v2185 = vpack.c.b16 %v1913, %v1905
    %v2186 = vpack.c.b16 %v1914, %v1906
    %v2187 = vpack.c.b16 %v1915, %v1907
    %v2188 = vpack.c.b16 %v1916, %v1908
    %v2189 = vpack.c.b16 %v1925, %v1917
    %v2190 = vpack.c.b16 %v1926, %v1918
    %v2191 = vpack.c.b16 %v1927, %v1919
    %v2192 = vpack.c.b16 %v1928, %v1920
    %v2193 = vpack.c.b16 %v1929, %v1921
    %v2194 = vpack.c.b16 %v1930, %v1922
    %v2195 = vpack.c.b16 %v1931, %v1923
    %v2196 = vpack.c.b16 %v1932, %v1924
    %v2197 = vpack.c.b16 %v1941, %v1933
    %v2198 = vpack.c.b16 %v1942, %v1934
    %v2199 = vpack.c.b16 %v1943, %v1935
    %v2200 = vpack.c.b16 %v1944, %v1936
    %v2201 = vpack.c.b16 %v1945, %v1937
    %v2202 = vpack.c.b16 %v1946, %v1938
    %v2203 = vpack.c.b16 %v1947, %v1939
    %v2204 = vpack.c.b16 %v1948, %v1940
    %2461 = vmatprep.subr.bf16.mxu0 %v1950
    %2462 = vmatpush1.bf16.msra.mxu0 %v1949
    %2463 = vmatprep.subr.bf16.mxu0 %v1958
    %2464 = vmatpush1.bf16.msra.mxu0 %v1957
    %2465 = vmatprep.subr.bf16.mxu0 %v1966
    %2466 = vmatpush1.bf16.msra.mxu0 %v1965
    %2467 = vmatprep.subr.bf16.mxu0 %v1974
    %2468 = vmatpush1.bf16.msra.mxu0 %v1973
    %2469 = vmatprep.subr.bf16.mxu0 %v1982
    %2470 = vmatpush1.bf16.msra.mxu0 %v1981
    %2471 = vmatprep.subr.bf16.mxu0 %v1990
    %2472 = vmatpush1.bf16.msra.mxu0 %v1989
    %2473 = vmatprep.subr.bf16.mxu0 %v1998
    %2474 = vmatpush1.bf16.msra.mxu0 %v1997
    %2475 = vmatprep.subr.bf16.mxu0 %v2006
    %2476 = vmatpush1.bf16.msra.mxu0 %v2005
    %2477 = vmatprep.subr.bf16.mxu0 %v2014
    %2478 = vmatpush1.bf16.msra.mxu0 %v2013
    %2479 = vmatprep.subr.bf16.mxu0 %v2022
    %2480 = vmatpush1.bf16.msra.mxu0 %v2021
    %2481 = vmatprep.subr.bf16.mxu0 %v2030
    %2482 = vmatpush1.bf16.msra.mxu0 %v2029
    %2483 = vmatprep.subr.bf16.mxu0 %v2038
    %2484 = vmatpush1.bf16.msra.mxu0 %v2037
    %2485 = vmatprep.subr.bf16.mxu0 %v2046
    %2486 = vmatpush1.bf16.msra.mxu0 %v2045
    %2487 = vmatprep.subr.bf16.mxu0 %v2054
    %2488 = vmatpush1.bf16.msra.mxu0 %v2053
    %2489 = vmatprep.subr.bf16.mxu0 %v2062
    %2490 = vmatpush1.bf16.msra.mxu0 %v2061
    %2491 = vmatprep.subr.bf16.mxu0 %v2070
    %2492 = vmatpush1.bf16.msra.mxu0 %v2069
    %2493 = vmatprep.mubr.bf16.mxu0 %v880
    %2494 = vmatmul.mubr.bf16.gmra.mrb[0].mxu0 %v879
    %v2495 = vpop.f32.mrb[0].mxu0
    %v2496 = vadd.f32 %v1144, %v2495
    %v2497 = vpop.f32.mrb[0].mxu0
    %v2498 = vadd.f32 %v1148, %v2497
    %v2499 = vpop.f32.mrb[0].mxu0
    %v2500 = vpop.f32.mrb[0].mxu0
    %2501 = vdwg.mxu0
    %2502 = vmatprep.subr.bf16.mxu0 %v2078
    %2503 = vmatpush1.bf16.msra.mxu0 %v2077
    %2504 = vmatprep.subr.bf16.mxu0 %v2086
    %2505 = vmatpush1.bf16.msra.mxu0 %v2085
    %2506 = vmatprep.subr.bf16.mxu0 %v2094
    %2507 = vmatpush1.bf16.msra.mxu0 %v2093
    %2508 = vmatprep.subr.bf16.mxu0 %v2102
    %2509 = vmatpush1.bf16.msra.mxu0 %v2101
    %2510 = vmatprep.subr.bf16.mxu0 %v2110
    %2511 = vmatpush1.bf16.msra.mxu0 %v2109
    %2512 = vmatprep.subr.bf16.mxu0 %v2118
    %2513 = vmatpush1.bf16.msra.mxu0 %v2117
    %2514 = vmatprep.subr.bf16.mxu0 %v2126
    %2515 = vmatpush1.bf16.msra.mxu0 %v2125
    %2516 = vmatprep.subr.bf16.mxu0 %v2134
    %2517 = vmatpush1.bf16.msra.mxu0 %v2133
    %2518 = vmatprep.subr.bf16.mxu0 %v2142
    %2519 = vmatpush1.bf16.msra.mxu0 %v2141
    %2520 = vmatprep.subr.bf16.mxu0 %v2150
    %2521 = vmatpush1.bf16.msra.mxu0 %v2149
    %2522 = vmatprep.subr.bf16.mxu0 %v2158
    %2523 = vmatpush1.bf16.msra.mxu0 %v2157
    %2524 = vmatprep.subr.bf16.mxu0 %v2166
    %2525 = vmatpush1.bf16.msra.mxu0 %v2165
    %2526 = vmatprep.subr.bf16.mxu0 %v2174
    %2527 = vmatpush1.bf16.msra.mxu0 %v2173
    %2528 = vmatprep.subr.bf16.mxu0 %v2182
    %2529 = vmatpush1.bf16.msra.mxu0 %v2181
    %2530 = vmatprep.subr.bf16.mxu0 %v2190
    %2531 = vmatpush1.bf16.msra.mxu0 %v2189
    %2532 = vmatprep.subr.bf16.mxu0 %v2198
    %2533 = vmatpush1.bf16.msra.mxu0 %v2197
    %2534 = vmatprep.mubr.bf16.mxu0 %v882
    %2535 = vmatmul.mubr.bf16.gmra.mrb[0].mxu0 %v881
    %v2536 = vpop.f32.mrb[0].mxu0
    %v2537 = vadd.f32 %v2496, %v2536
    %v2538 = vpop.f32.mrb[0].mxu0
    %v2539 = vadd.f32 %v2498, %v2538
    %v2540 = vpop.f32.mrb[0].mxu0
    %v2541 = vpop.f32.mrb[0].mxu0
    %2542 = vdwg.mxu0
    %2543 = vmatprep.subr.bf16.mxu0 %v1952
    %2544 = vmatpush1.bf16.msra.mxu0 %v1951
    %2545 = vmatprep.subr.bf16.mxu0 %v1960
    %2546 = vmatpush1.bf16.msra.mxu0 %v1959
    %2547 = vmatprep.subr.bf16.mxu0 %v1968
    %2548 = vmatpush1.bf16.msra.mxu0 %v1967
    %2549 = vmatprep.subr.bf16.mxu0 %v1976
    %2550 = vmatpush1.bf16.msra.mxu0 %v1975
    %2551 = vmatprep.subr.bf16.mxu0 %v1984
    %2552 = vmatpush1.bf16.msra.mxu0 %v1983
    %2553 = vmatprep.subr.bf16.mxu0 %v1992
    %2554 = vmatpush1.bf16.msra.mxu0 %v1991
    %2555 = vmatprep.subr.bf16.mxu0 %v2000
    %2556 = vmatpush1.bf16.msra.mxu0 %v1999
    %2557 = vmatprep.subr.bf16.mxu0 %v2008
    %2558 = vmatpush1.bf16.msra.mxu0 %v2007
    %2559 = vmatprep.subr.bf16.mxu0 %v2016
    %2560 = vmatpush1.bf16.msra.mxu0 %v2015
    %2561 = vmatprep.subr.bf16.mxu0 %v2024
    %2562 = vmatpush1.bf16.msra.mxu0 %v2023
    %2563 = vmatprep.subr.bf16.mxu0 %v2032
    %2564 = vmatpush1.bf16.msra.mxu0 %v2031
    %2565 = vmatprep.subr.bf16.mxu0 %v2040
    %2566 = vmatpush1.bf16.msra.mxu0 %v2039
    %2567 = vmatprep.subr.bf16.mxu0 %v2048
    %2568 = vmatpush1.bf16.msra.mxu0 %v2047
    %2569 = vmatprep.subr.bf16.mxu0 %v2056
    %2570 = vmatpush1.bf16.msra.mxu0 %v2055
    %2571 = vmatprep.subr.bf16.mxu0 %v2064
    %2572 = vmatpush1.bf16.msra.mxu0 %v2063
    %2573 = vmatprep.subr.bf16.mxu0 %v2072
    %2574 = vmatpush1.bf16.msra.mxu0 %v2071
    %2575 = vmatprep.mubr.bf16.mxu0 %v880
    %2576 = vmatmul.mubr.bf16.gmra.mrb[0].mxu0 %v879
    %v2577 = vpop.f32.mrb[0].mxu0
    %v2578 = vadd.f32 %v1152, %v2577
    %v2579 = vpop.f32.mrb[0].mxu0
    %v2580 = vadd.f32 %v1156, %v2579
    %v2581 = vpop.f32.mrb[0].mxu0
    %v2582 = vpop.f32.mrb[0].mxu0
    %2583 = vdwg.mxu0
    %2584 = vmatprep.subr.bf16.mxu0 %v2080
    %2585 = vmatpush1.bf16.msra.mxu0 %v2079
    %2586 = vmatprep.subr.bf16.mxu0 %v2088
    %2587 = vmatpush1.bf16.msra.mxu0 %v2087
    %2588 = vmatprep.subr.bf16.mxu0 %v2096
    %2589 = vmatpush1.bf16.msra.mxu0 %v2095
    %2590 = vmatprep.subr.bf16.mxu0 %v2104
    %2591 = vmatpush1.bf16.msra.mxu0 %v2103
    %2592 = vmatprep.subr.bf16.mxu0 %v2112
    %2593 = vmatpush1.bf16.msra.mxu0 %v2111
    %2594 = vmatprep.subr.bf16.mxu0 %v2120
    %2595 = vmatpush1.bf16.msra.mxu0 %v2119
    %2596 = vmatprep.subr.bf16.mxu0 %v2128
    %2597 = vmatpush1.bf16.msra.mxu0 %v2127
    %2598 = vmatprep.subr.bf16.mxu0 %v2136
    %2599 = vmatpush1.bf16.msra.mxu0 %v2135
    %2600 = vmatprep.subr.bf16.mxu0 %v2144
    %2601 = vmatpush1.bf16.msra.mxu0 %v2143
    %2602 = vmatprep.subr.bf16.mxu0 %v2152
    %2603 = vmatpush1.bf16.msra.mxu0 %v2151
    %2604 = vmatprep.subr.bf16.mxu0 %v2160
    %2605 = vmatpush1.bf16.msra.mxu0 %v2159
    %2606 = vmatprep.subr.bf16.mxu0 %v2168
    %2607 = vmatpush1.bf16.msra.mxu0 %v2167
    %2608 = vmatprep.subr.bf16.mxu0 %v2176
    %2609 = vmatpush1.bf16.msra.mxu0 %v2175
    %2610 = vmatprep.subr.bf16.mxu0 %v2184
    %2611 = vmatpush1.bf16.msra.mxu0 %v2183
    %2612 = vmatprep.subr.bf16.mxu0 %v2192
    %2613 = vmatpush1.bf16.msra.mxu0 %v2191
    %2614 = vmatprep.subr.bf16.mxu0 %v2200
    %2615 = vmatpush1.bf16.msra.mxu0 %v2199
    %2616 = vmatprep.mubr.bf16.mxu0 %v882
    %2617 = vmatmul.mubr.bf16.gmra.mrb[0].mxu0 %v881
    %v2618 = vpop.f32.mrb[0].mxu0
    %v2619 = vadd.f32 %v2578, %v2618
    %v2620 = vpop.f32.mrb[0].mxu0
    %v2621 = vadd.f32 %v2580, %v2620
    %v2622 = vpop.f32.mrb[0].mxu0
    %v2623 = vpop.f32.mrb[0].mxu0
    %2624 = vdwg.mxu0
    %2625 = vmatprep.subr.bf16.mxu0 %v1954
    %2626 = vmatpush1.bf16.msra.mxu0 %v1953
    %2627 = vmatprep.subr.bf16.mxu0 %v1962
    %2628 = vmatpush1.bf16.msra.mxu0 %v1961
    %2629 = vmatprep.subr.bf16.mxu0 %v1970
    %2630 = vmatpush1.bf16.msra.mxu0 %v1969
    %2631 = vmatprep.subr.bf16.mxu0 %v1978
    %2632 = vmatpush1.bf16.msra.mxu0 %v1977
    %2633 = vmatprep.subr.bf16.mxu0 %v1986
    %2634 = vmatpush1.bf16.msra.mxu0 %v1985
    %2635 = vmatprep.subr.bf16.mxu0 %v1994
    %2636 = vmatpush1.bf16.msra.mxu0 %v1993
    %2637 = vmatprep.subr.bf16.mxu0 %v2002
    %2638 = vmatpush1.bf16.msra.mxu0 %v2001
    %2639 = vmatprep.subr.bf16.mxu0 %v2010
    %2640 = vmatpush1.bf16.msra.mxu0 %v2009
    %2641 = vmatprep.subr.bf16.mxu0 %v2018
    %2642 = vmatpush1.bf16.msra.mxu0 %v2017
    %2643 = vmatprep.subr.bf16.mxu0 %v2026
    %2644 = vmatpush1.bf16.msra.mxu0 %v2025
    %2645 = vmatprep.subr.bf16.mxu0 %v2034
    %2646 = vmatpush1.bf16.msra.mxu0 %v2033
    %2647 = vmatprep.subr.bf16.mxu0 %v2042
    %2648 = vmatpush1.bf16.msra.mxu0 %v2041
    %2649 = vmatprep.subr.bf16.mxu0 %v2050
    %2650 = vmatpush1.bf16.msra.mxu0 %v2049
    %2651 = vmatprep.subr.bf16.mxu0 %v2058
    %2652 = vmatpush1.bf16.msra.mxu0 %v2057
    %2653 = vmatprep.subr.bf16.mxu0 %v2066
    %2654 = vmatpush1.bf16.msra.mxu0 %v2065
    %2655 = vmatprep.subr.bf16.mxu0 %v2074
    %2656 = vmatpush1.bf16.msra.mxu0 %v2073
    %2657 = vmatprep.mubr.bf16.mxu0 %v880
    %2658 = vmatmul.mubr.bf16.gmra.mrb[0].mxu0 %v879
    %v2659 = vpop.f32.mrb[0].mxu0
    %v2660 = vadd.f32 %v1160, %v2659
    %v2661 = vpop.f32.mrb[0].mxu0
    %v2662 = vadd.f32 %v1164, %v2661
    %v2663 = vpop.f32.mrb[0].mxu0
    %v2664 = vpop.f32.mrb[0].mxu0
    %2665 = vdwg.mxu0
    %2666 = vmatprep.subr.bf16.mxu0 %v2082
    %2667 = vmatpush1.bf16.msra.mxu0 %v2081
    %2668 = vmatprep.subr.bf16.mxu0 %v2090
    %2669 = vmatpush1.bf16.msra.mxu0 %v2089
    %2670 = vmatprep.subr.bf16.mxu0 %v2098
    %2671 = vmatpush1.bf16.msra.mxu0 %v2097
    %2672 = vmatprep.subr.bf16.mxu0 %v2106
    %2673 = vmatpush1.bf16.msra.mxu0 %v2105
    %2674 = vmatprep.subr.bf16.mxu0 %v2114
    %2675 = vmatpush1.bf16.msra.mxu0 %v2113
    %2676 = vmatprep.subr.bf16.mxu0 %v2122
    %2677 = vmatpush1.bf16.msra.mxu0 %v2121
    %2678 = vmatprep.subr.bf16.mxu0 %v2130
    %2679 = vmatpush1.bf16.msra.mxu0 %v2129
    %2680 = vmatprep.subr.bf16.mxu0 %v2138
    %2681 = vmatpush1.bf16.msra.mxu0 %v2137
    %2682 = vmatprep.subr.bf16.mxu0 %v2146
    %2683 = vmatpush1.bf16.msra.mxu0 %v2145
    %2684 = vmatprep.subr.bf16.mxu0 %v2154
    %2685 = vmatpush1.bf16.msra.mxu0 %v2153
    %2686 = vmatprep.subr.bf16.mxu0 %v2162
    %2687 = vmatpush1.bf16.msra.mxu0 %v2161
    %2688 = vmatprep.subr.bf16.mxu0 %v2170
    %2689 = vmatpush1.bf16.msra.mxu0 %v2169
    %2690 = vmatprep.subr.bf16.mxu0 %v2178
    %2691 = vmatpush1.bf16.msra.mxu0 %v2177
    %2692 = vmatprep.subr.bf16.mxu0 %v2186
    %2693 = vmatpush1.bf16.msra.mxu0 %v2185
    %2694 = vmatprep.subr.bf16.mxu0 %v2194
    %2695 = vmatpush1.bf16.msra.mxu0 %v2193
    %2696 = vmatprep.subr.bf16.mxu0 %v2202
    %2697 = vmatpush1.bf16.msra.mxu0 %v2201
    %2698 = vmatprep.mubr.bf16.mxu0 %v882
    %2699 = vmatmul.mubr.bf16.gmra.mrb[0].mxu0 %v881
    %v2700 = vpop.f32.mrb[0].mxu0
    %v2701 = vadd.f32 %v2660, %v2700
    %v2702 = vpop.f32.mrb[0].mxu0
    %v2703 = vadd.f32 %v2662, %v2702
    %v2704 = vpop.f32.mrb[0].mxu0
    %v2705 = vpop.f32.mrb[0].mxu0
    %2706 = vdwg.mxu0
    %2707 = vmatprep.subr.bf16.mxu0 %v1956
    %2708 = vmatpush1.bf16.msra.mxu0 %v1955
    %2709 = vmatprep.subr.bf16.mxu0 %v1964
    %2710 = vmatpush1.bf16.msra.mxu0 %v1963
    %2711 = vmatprep.subr.bf16.mxu0 %v1972
    %2712 = vmatpush1.bf16.msra.mxu0 %v1971
    %2713 = vmatprep.subr.bf16.mxu0 %v1980
    %2714 = vmatpush1.bf16.msra.mxu0 %v1979
    %2715 = vmatprep.subr.bf16.mxu0 %v1988
    %2716 = vmatpush1.bf16.msra.mxu0 %v1987
    %2717 = vmatprep.subr.bf16.mxu0 %v1996
    %2718 = vmatpush1.bf16.msra.mxu0 %v1995
    %2719 = vmatprep.subr.bf16.mxu0 %v2004
    %2720 = vmatpush1.bf16.msra.mxu0 %v2003
    %2721 = vmatprep.subr.bf16.mxu0 %v2012
    %2722 = vmatpush1.bf16.msra.mxu0 %v2011
    %2723 = vmatprep.subr.bf16.mxu0 %v2020
    %2724 = vmatpush1.bf16.msra.mxu0 %v2019
    %2725 = vmatprep.subr.bf16.mxu0 %v2028
    %2726 = vmatpush1.bf16.msra.mxu0 %v2027
    %2727 = vmatprep.subr.bf16.mxu0 %v2036
    %2728 = vmatpush1.bf16.msra.mxu0 %v2035
    %2729 = vmatprep.subr.bf16.mxu0 %v2044
    %2730 = vmatpush1.bf16.msra.mxu0 %v2043
    %2731 = vmatprep.subr.bf16.mxu0 %v2052
    %2732 = vmatpush1.bf16.msra.mxu0 %v2051
    %2733 = vmatprep.subr.bf16.mxu0 %v2060
    %2734 = vmatpush1.bf16.msra.mxu0 %v2059
    %2735 = vmatprep.subr.bf16.mxu0 %v2068
    %2736 = vmatpush1.bf16.msra.mxu0 %v2067
    %2737 = vmatprep.subr.bf16.mxu0 %v2076
    %2738 = vmatpush1.bf16.msra.mxu0 %v2075
    %2739 = vmatprep.mubr.bf16.mxu0 %v880
    %2740 = vmatmul.mubr.bf16.gmra.mrb[0].mxu0 %v879
    %v2741 = vpop.f32.mrb[0].mxu0
    %v2742 = vadd.f32 %v1168, %v2741
    %v2743 = vpop.f32.mrb[0].mxu0
    %v2744 = vadd.f32 %v1172, %v2743
    %v2745 = vpop.f32.mrb[0].mxu0
    %v2746 = vpop.f32.mrb[0].mxu0
    %2747 = vdwg.mxu0
    %2748 = vmatprep.subr.bf16.mxu0 %v2084
    %2749 = vmatpush1.bf16.msra.mxu0 %v2083
    %2750 = vmatprep.subr.bf16.mxu0 %v2092
    %2751 = vmatpush1.bf16.msra.mxu0 %v2091
    %2752 = vmatprep.subr.bf16.mxu0 %v2100
    %2753 = vmatpush1.bf16.msra.mxu0 %v2099
    %2754 = vmatprep.subr.bf16.mxu0 %v2108
    %2755 = vmatpush1.bf16.msra.mxu0 %v2107
    %2756 = vmatprep.subr.bf16.mxu0 %v2116
    %2757 = vmatpush1.bf16.msra.mxu0 %v2115
    %2758 = vmatprep.subr.bf16.mxu0 %v2124
    %2759 = vmatpush1.bf16.msra.mxu0 %v2123
    %2760 = vmatprep.subr.bf16.mxu0 %v2132
    %2761 = vmatpush1.bf16.msra.mxu0 %v2131
    %2762 = vmatprep.subr.bf16.mxu0 %v2140
    %2763 = vmatpush1.bf16.msra.mxu0 %v2139
    %2764 = vmatprep.subr.bf16.mxu0 %v2148
    %2765 = vmatpush1.bf16.msra.mxu0 %v2147
    %2766 = vmatprep.subr.bf16.mxu0 %v2156
    %2767 = vmatpush1.bf16.msra.mxu0 %v2155
    %2768 = vmatprep.subr.bf16.mxu0 %v2164
    %2769 = vmatpush1.bf16.msra.mxu0 %v2163
    %2770 = vmatprep.subr.bf16.mxu0 %v2172
    %2771 = vmatpush1.bf16.msra.mxu0 %v2171
    %2772 = vmatprep.subr.bf16.mxu0 %v2180
    %2773 = vmatpush1.bf16.msra.mxu0 %v2179
    %2774 = vmatprep.subr.bf16.mxu0 %v2188
    %2775 = vmatpush1.bf16.msra.mxu0 %v2187
    %2776 = vmatprep.subr.bf16.mxu0 %v2196
    %2777 = vmatpush1.bf16.msra.mxu0 %v2195
    %2778 = vmatprep.subr.bf16.mxu0 %v2204
    %2779 = vmatpush1.bf16.msra.mxu0 %v2203
    %2780 = vmatprep.mubr.bf16.mxu0 %v882
    %2781 = vmatmul.mubr.bf16.gmra.mrb[0].mxu0 %v881
    %v2782 = vpop.f32.mrb[0].mxu0
    %v2783 = vadd.f32 %v2742, %v2782
    %v2784 = vpop.f32.mrb[0].mxu0
    %v2785 = vadd.f32 %v2744, %v2784
    %v2786 = vpop.f32.mrb[0].mxu0
    %v2787 = vpop.f32.mrb[0].mxu0
    %2788 = vdwg.mxu0
    %v2789 = vmax.f32 %v2537, 0.0
    %v2790 = vmax.f32 %v2539, 0.0
    %v2791 = vmax.f32 %v2619, 0.0
    %v2792 = vmax.f32 %v2621, 0.0
    %v2793 = vmax.f32 %v2701, 0.0
    %v2794 = vmax.f32 %v2703, 0.0
    %v2795 = vmax.f32 %v2783, 0.0
    %v2796 = vmax.f32 %v2785, 0.0
    %v2797 = vpack.c.bf16 %v2789, %v2789
    %v2798 = vpack.c.bf16 %v2790, %v2790
    %v2799 = vpack.c.bf16 %v2791, %v2791
    %v2800 = vpack.c.bf16 %v2792, %v2792
    %v2801 = vpack.c.bf16 %v2793, %v2793
    %v2802 = vpack.c.bf16 %v2794, %v2794
    %v2803 = vpack.c.bf16 %v2795, %v2795
    %v2804 = vpack.c.bf16 %v2796, %v2796
    %v2805 = vld [vmem:[#allocation11] sm:$0xf]
    %v2806 = vld [vmem:[#allocation11 + $0x4] sm:$0xf]
    %v2807 = vld [vmem:[#allocation11 + $0x8] sm:$0xf]
    %v2808 = vld [vmem:[#allocation11 + $0xc] sm:$0xf]
    %v2809 = vld [vmem:[#allocation11 + $0x10] sm:$0xf]
    %v2810 = vld [vmem:[#allocation11 + $0x14] sm:$0xf]
    %v2811 = vld [vmem:[#allocation11 + $0x18] sm:$0xf]
    %v2812 = vld [vmem:[#allocation11 + $0x1c] sm:$0xf]
    %v2813 = vld [vmem:[#allocation11 + $0x20] sm:$0xf]
    %v2814 = vld [vmem:[#allocation11 + $0x24] sm:$0xf]
    %v2815 = vld [vmem:[#allocation11 + $0x28] sm:$0xf]
    %v2816 = vld [vmem:[#allocation11 + $0x2c] sm:$0xf]
    %v2817 = vld [vmem:[#allocation11 + $0x30] sm:$0xf]
    %v2818 = vld [vmem:[#allocation11 + $0x34] sm:$0xf]
    %v2819 = vld [vmem:[#allocation11 + $0x38] sm:$0xf]
    %v2820 = vld [vmem:[#allocation11 + $0x3c] sm:$0xf]
    %v2821 = vld [vmem:[#allocation11 + $0x40] sm:$0xf]
    %v2822 = vld [vmem:[#allocation11 + $0x44] sm:$0xf]
    %v2823 = vld [vmem:[#allocation11 + $0x48] sm:$0xf]
    %v2824 = vld [vmem:[#allocation11 + $0x4c] sm:$0xf]
    %v2825 = vld [vmem:[#allocation11 + $0x50] sm:$0xf]
    %v2826 = vld [vmem:[#allocation11 + $0x54] sm:$0xf]
    %v2827 = vld [vmem:[#allocation11 + $0x58] sm:$0xf]
    %v2828 = vld [vmem:[#allocation11 + $0x5c] sm:$0xf]
    %v2829 = vld [vmem:[#allocation11 + $0x60] sm:$0xf]
    %v2830 = vld [vmem:[#allocation11 + $0x64] sm:$0xf]
    %v2831 = vld [vmem:[#allocation11 + $0x68] sm:$0xf]
    %v2832 = vld [vmem:[#allocation11 + $0x6c] sm:$0xf]
    %v2833 = vld [vmem:[#allocation11 + $0x70] sm:$0xf]
    %v2834 = vld [vmem:[#allocation11 + $0x74] sm:$0xf]
    %v2835 = vld [vmem:[#allocation11 + $0x78] sm:$0xf]
    %v2836 = vld [vmem:[#allocation11 + $0x7c] sm:$0xf]
    %v2837 = vld [vmem:[#allocation11 + $0x80] sm:$0xf]
    %v2838 = vld [vmem:[#allocation11 + $0x84] sm:$0xf]
    %v2839 = vld [vmem:[#allocation11 + $0x88] sm:$0xf]
    %v2840 = vld [vmem:[#allocation11 + $0x8c] sm:$0xf]
    %v2841 = vld [vmem:[#allocation11 + $0x90] sm:$0xf]
    %v2842 = vld [vmem:[#allocation11 + $0x94] sm:$0xf]
    %v2843 = vld [vmem:[#allocation11 + $0x98] sm:$0xf]
    %v2844 = vld [vmem:[#allocation11 + $0x9c] sm:$0xf]
    %v2845 = vld [vmem:[#allocation11 + $0xa0] sm:$0xf]
    %v2846 = vld [vmem:[#allocation11 + $0xa4] sm:$0xf]
    %v2847 = vld [vmem:[#allocation11 + $0xa8] sm:$0xf]
    %v2848 = vld [vmem:[#allocation11 + $0xac] sm:$0xf]
    %v2849 = vld [vmem:[#allocation11 + $0xb0] sm:$0xf]
    %v2850 = vld [vmem:[#allocation11 + $0xb4] sm:$0xf]
    %v2851 = vld [vmem:[#allocation11 + $0xb8] sm:$0xf]
    %v2852 = vld [vmem:[#allocation11 + $0xbc] sm:$0xf]
    %v2853 = vld [vmem:[#allocation11 + $0xc0] sm:$0xf]
    %v2854 = vld [vmem:[#allocation11 + $0xc4] sm:$0xf]
    %v2855 = vld [vmem:[#allocation11 + $0xc8] sm:$0xf]
    %v2856 = vld [vmem:[#allocation11 + $0xcc] sm:$0xf]
    %v2857 = vld [vmem:[#allocation11 + $0xd0] sm:$0xf]
    %v2858 = vld [vmem:[#allocation11 + $0xd4] sm:$0xf]
    %v2859 = vld [vmem:[#allocation11 + $0xd8] sm:$0xf]
    %v2860 = vld [vmem:[#allocation11 + $0xdc] sm:$0xf]
    %v2861 = vld [vmem:[#allocation11 + $0xe0] sm:$0xf]
    %v2862 = vld [vmem:[#allocation11 + $0xe4] sm:$0xf]
    %v2863 = vld [vmem:[#allocation11 + $0xe8] sm:$0xf]
    %v2864 = vld [vmem:[#allocation11 + $0xec] sm:$0xf]
    %v2865 = vld [vmem:[#allocation11 + $0xf0] sm:$0xf]
    %v2866 = vld [vmem:[#allocation11 + $0xf4] sm:$0xf]
    %v2867 = vld [vmem:[#allocation11 + $0xf8] sm:$0xf]
    %v2868 = vld [vmem:[#allocation11 + $0xfc] sm:$0xf]
    %v2869 = vld [vmem:[#allocation11 + $0x100] sm:$0xf]
    %v2870 = vld [vmem:[#allocation11 + $0x104] sm:$0xf]
    %v2871 = vld [vmem:[#allocation11 + $0x108] sm:$0xf]
    %v2872 = vld [vmem:[#allocation11 + $0x10c] sm:$0xf]
    %v2873 = vld [vmem:[#allocation11 + $0x110] sm:$0xf]
    %v2874 = vld [vmem:[#allocation11 + $0x114] sm:$0xf]
    %v2875 = vld [vmem:[#allocation11 + $0x118] sm:$0xf]
    %v2876 = vld [vmem:[#allocation11 + $0x11c] sm:$0xf]
    %v2877 = vld [vmem:[#allocation11 + $0x120] sm:$0xf]
    %v2878 = vld [vmem:[#allocation11 + $0x124] sm:$0xf]
    %v2879 = vld [vmem:[#allocation11 + $0x128] sm:$0xf]
    %v2880 = vld [vmem:[#allocation11 + $0x12c] sm:$0xf]
    %v2881 = vld [vmem:[#allocation11 + $0x130] sm:$0xf]
    %v2882 = vld [vmem:[#allocation11 + $0x134] sm:$0xf]
    %v2883 = vld [vmem:[#allocation11 + $0x138] sm:$0xf]
    %v2884 = vld [vmem:[#allocation11 + $0x13c] sm:$0xf]
    %v2885 = vld [vmem:[#allocation11 + $0x140] sm:$0xf]
    %v2886 = vld [vmem:[#allocation11 + $0x144] sm:$0xf]
    %v2887 = vld [vmem:[#allocation11 + $0x148] sm:$0xf]
    %v2888 = vld [vmem:[#allocation11 + $0x14c] sm:$0xf]
    %v2889 = vld [vmem:[#allocation11 + $0x150] sm:$0xf]
    %v2890 = vld [vmem:[#allocation11 + $0x154] sm:$0xf]
    %v2891 = vld [vmem:[#allocation11 + $0x158] sm:$0xf]
    %v2892 = vld [vmem:[#allocation11 + $0x15c] sm:$0xf]
    %v2893 = vld [vmem:[#allocation11 + $0x160] sm:$0xf]
    %v2894 = vld [vmem:[#allocation11 + $0x164] sm:$0xf]
    %v2895 = vld [vmem:[#allocation11 + $0x168] sm:$0xf]
    %v2896 = vld [vmem:[#allocation11 + $0x16c] sm:$0xf]
    %v2897 = vld [vmem:[#allocation11 + $0x170] sm:$0xf]
    %v2898 = vld [vmem:[#allocation11 + $0x174] sm:$0xf]
    %v2899 = vld [vmem:[#allocation11 + $0x178] sm:$0xf]
    %v2900 = vld [vmem:[#allocation11 + $0x17c] sm:$0xf]
    %v2901 = vld [vmem:[#allocation11 + $0x180] sm:$0xf]
    %v2902 = vld [vmem:[#allocation11 + $0x184] sm:$0xf]
    %v2903 = vld [vmem:[#allocation11 + $0x188] sm:$0xf]
    %v2904 = vld [vmem:[#allocation11 + $0x18c] sm:$0xf]
    %v2905 = vld [vmem:[#allocation11 + $0x190] sm:$0xf]
    %v2906 = vld [vmem:[#allocation11 + $0x194] sm:$0xf]
    %v2907 = vld [vmem:[#allocation11 + $0x198] sm:$0xf]
    %v2908 = vld [vmem:[#allocation11 + $0x19c] sm:$0xf]
    %v2909 = vld [vmem:[#allocation11 + $0x1a0] sm:$0xf]
    %v2910 = vld [vmem:[#allocation11 + $0x1a4] sm:$0xf]
    %v2911 = vld [vmem:[#allocation11 + $0x1a8] sm:$0xf]
    %v2912 = vld [vmem:[#allocation11 + $0x1ac] sm:$0xf]
    %v2913 = vld [vmem:[#allocation11 + $0x1b0] sm:$0xf]
    %v2914 = vld [vmem:[#allocation11 + $0x1b4] sm:$0xf]
    %v2915 = vld [vmem:[#allocation11 + $0x1b8] sm:$0xf]
    %v2916 = vld [vmem:[#allocation11 + $0x1bc] sm:$0xf]
    %v2917 = vld [vmem:[#allocation11 + $0x1c0] sm:$0xf]
    %v2918 = vld [vmem:[#allocation11 + $0x1c4] sm:$0xf]
    %v2919 = vld [vmem:[#allocation11 + $0x1c8] sm:$0xf]
    %v2920 = vld [vmem:[#allocation11 + $0x1cc] sm:$0xf]
    %v2921 = vld [vmem:[#allocation11 + $0x1d0] sm:$0xf]
    %v2922 = vld [vmem:[#allocation11 + $0x1d4] sm:$0xf]
    %v2923 = vld [vmem:[#allocation11 + $0x1d8] sm:$0xf]
    %v2924 = vld [vmem:[#allocation11 + $0x1dc] sm:$0xf]
    %v2925 = vld [vmem:[#allocation11 + $0x1e0] sm:$0xf]
    %v2926 = vld [vmem:[#allocation11 + $0x1e4] sm:$0xf]
    %v2927 = vld [vmem:[#allocation11 + $0x1e8] sm:$0xf]
    %v2928 = vld [vmem:[#allocation11 + $0x1ec] sm:$0xf]
    %v2929 = vld [vmem:[#allocation11 + $0x1f0] sm:$0xf]
    %v2930 = vld [vmem:[#allocation11 + $0x1f4] sm:$0xf]
    %v2931 = vld [vmem:[#allocation11 + $0x1f8] sm:$0xf]
    %v2932 = vld [vmem:[#allocation11 + $0x1fc] sm:$0xf]
    %v2933 = vld [vmem:[%s10] sm:$0x1]
    %v2935 = vlaneseq
    %v2936 = vshrl.u32 %v2935, 7
    %v2937 = vsub.s32 0, %v2936
    %v2938 = vrot.slane %v2933, %v2937
    %v3068 = vunpack.c.l.b16 %v2805
    %v3069 = vunpack.c.l.b16 %v2806
    %v3070 = vunpack.c.l.b16 %v2807
    %v3071 = vunpack.c.l.b16 %v2808
    %v3072 = vunpack.c.l.b16 %v2809
    %v3073 = vunpack.c.l.b16 %v2810
    %v3074 = vunpack.c.l.b16 %v2811
    %v3075 = vunpack.c.l.b16 %v2812
    %v3076 = vunpack.c.l.b16 %v2813
    %v3077 = vunpack.c.l.b16 %v2814
    %v3078 = vunpack.c.l.b16 %v2815
    %v3079 = vunpack.c.l.b16 %v2816
    %v3080 = vunpack.c.l.b16 %v2817
    %v3081 = vunpack.c.l.b16 %v2818
    %v3082 = vunpack.c.l.b16 %v2819
    %v3083 = vunpack.c.l.b16 %v2820
    %v3084 = vunpack.c.l.b16 %v2821
    %v3085 = vunpack.c.l.b16 %v2822
    %v3086 = vunpack.c.l.b16 %v2823
    %v3087 = vunpack.c.l.b16 %v2824
    %v3088 = vunpack.c.l.b16 %v2825
    %v3089 = vunpack.c.l.b16 %v2826
    %v3090 = vunpack.c.l.b16 %v2827
    %v3091 = vunpack.c.l.b16 %v2828
    %v3092 = vunpack.c.l.b16 %v2829
    %v3093 = vunpack.c.l.b16 %v2830
    %v3094 = vunpack.c.l.b16 %v2831
    %v3095 = vunpack.c.l.b16 %v2832
    %v3096 = vunpack.c.l.b16 %v2833
    %v3097 = vunpack.c.l.b16 %v2834
    %v3098 = vunpack.c.l.b16 %v2835
    %v3099 = vunpack.c.l.b16 %v2836
    %v3100 = vunpack.c.l.b16 %v2837
    %v3101 = vunpack.c.l.b16 %v2838
    %v3102 = vunpack.c.l.b16 %v2839
    %v3103 = vunpack.c.l.b16 %v2840
    %v3104 = vunpack.c.l.b16 %v2841
    %v3105 = vunpack.c.l.b16 %v2842
    %v3106 = vunpack.c.l.b16 %v2843
    %v3107 = vunpack.c.l.b16 %v2844
    %v3108 = vunpack.c.l.b16 %v2845
    %v3109 = vunpack.c.l.b16 %v2846
    %v3110 = vunpack.c.l.b16 %v2847
    %v3111 = vunpack.c.l.b16 %v2848
    %v3112 = vunpack.c.l.b16 %v2849
    %v3113 = vunpack.c.l.b16 %v2850
    %v3114 = vunpack.c.l.b16 %v2851
    %v3115 = vunpack.c.l.b16 %v2852
    %v3116 = vunpack.c.l.b16 %v2853
    %v3117 = vunpack.c.l.b16 %v2854
    %v3118 = vunpack.c.l.b16 %v2855
    %v3119 = vunpack.c.l.b16 %v2856
    %v3120 = vunpack.c.l.b16 %v2857
    %v3121 = vunpack.c.l.b16 %v2858
    %v3122 = vunpack.c.l.b16 %v2859
    %v3123 = vunpack.c.l.b16 %v2860
    %v3124 = vunpack.c.l.b16 %v2861
    %v3125 = vunpack.c.l.b16 %v2862
    %v3126 = vunpack.c.l.b16 %v2863
    %v3127 = vunpack.c.l.b16 %v2864
    %v3128 = vunpack.c.l.b16 %v2865
    %v3129 = vunpack.c.l.b16 %v2866
    %v3130 = vunpack.c.l.b16 %v2867
    %v3131 = vunpack.c.l.b16 %v2868
    %v3132 = vunpack.c.l.b16 %v2869
    %v3133 = vunpack.c.l.b16 %v2870
    %v3134 = vunpack.c.l.b16 %v2871
    %v3135 = vunpack.c.l.b16 %v2872
    %v3136 = vunpack.c.l.b16 %v2873
    %v3137 = vunpack.c.l.b16 %v2874
    %v3138 = vunpack.c.l.b16 %v2875
    %v3139 = vunpack.c.l.b16 %v2876
    %v3140 = vunpack.c.l.b16 %v2877
    %v3141 = vunpack.c.l.b16 %v2878
    %v3142 = vunpack.c.l.b16 %v2879
    %v3143 = vunpack.c.l.b16 %v2880
    %v3144 = vunpack.c.l.b16 %v2881
    %v3145 = vunpack.c.l.b16 %v2882
    %v3146 = vunpack.c.l.b16 %v2883
    %v3147 = vunpack.c.l.b16 %v2884
    %v3148 = vunpack.c.l.b16 %v2885
    %v3149 = vunpack.c.l.b16 %v2886
    %v3150 = vunpack.c.l.b16 %v2887
    %v3151 = vunpack.c.l.b16 %v2888
    %v3152 = vunpack.c.l.b16 %v2889
    %v3153 = vunpack.c.l.b16 %v2890
    %v3154 = vunpack.c.l.b16 %v2891
    %v3155 = vunpack.c.l.b16 %v2892
    %v3156 = vunpack.c.l.b16 %v2893
    %v3157 = vunpack.c.l.b16 %v2894
    %v3158 = vunpack.c.l.b16 %v2895
    %v3159 = vunpack.c.l.b16 %v2896
    %v3160 = vunpack.c.l.b16 %v2897
    %v3161 = vunpack.c.l.b16 %v2898
    %v3162 = vunpack.c.l.b16 %v2899
    %v3163 = vunpack.c.l.b16 %v2900
    %v3164 = vunpack.c.l.b16 %v2901
    %v3165 = vunpack.c.l.b16 %v2902
    %v3166 = vunpack.c.l.b16 %v2903
    %v3167 = vunpack.c.l.b16 %v2904
    %v3168 = vunpack.c.l.b16 %v2905
    %v3169 = vunpack.c.l.b16 %v2906
    %v3170 = vunpack.c.l.b16 %v2907
    %v3171 = vunpack.c.l.b16 %v2908
    %v3172 = vunpack.c.l.b16 %v2909
    %v3173 = vunpack.c.l.b16 %v2910
    %v3174 = vunpack.c.l.b16 %v2911
    %v3175 = vunpack.c.l.b16 %v2912
    %v3176 = vunpack.c.l.b16 %v2913
    %v3177 = vunpack.c.l.b16 %v2914
    %v3178 = vunpack.c.l.b16 %v2915
    %v3179 = vunpack.c.l.b16 %v2916
    %v3180 = vunpack.c.l.b16 %v2917
    %v3181 = vunpack.c.l.b16 %v2918
    %v3182 = vunpack.c.l.b16 %v2919
    %v3183 = vunpack.c.l.b16 %v2920
    %v3184 = vunpack.c.l.b16 %v2921
    %v3185 = vunpack.c.l.b16 %v2922
    %v3186 = vunpack.c.l.b16 %v2923
    %v3187 = vunpack.c.l.b16 %v2924
    %v3188 = vunpack.c.l.b16 %v2925
    %v3189 = vunpack.c.l.b16 %v2926
    %v3190 = vunpack.c.l.b16 %v2927
    %v3191 = vunpack.c.l.b16 %v2928
    %v3192 = vunpack.c.l.b16 %v2929
    %v3193 = vunpack.c.l.b16 %v2930
    %v3194 = vunpack.c.l.b16 %v2931
    %v3195 = vunpack.c.l.b16 %v2932
    %v3196 = vpack.c.b16 %v3069, %v3068
    %v3197 = vpack.c.b16 %v3071, %v3070
    %v3198 = vpack.c.b16 %v3073, %v3072
    %v3199 = vpack.c.b16 %v3075, %v3074
    %v3200 = vpack.c.b16 %v3077, %v3076
    %v3201 = vpack.c.b16 %v3079, %v3078
    %v3202 = vpack.c.b16 %v3081, %v3080
    %v3203 = vpack.c.b16 %v3083, %v3082
    %v3204 = vpack.c.b16 %v3085, %v3084
    %v3205 = vpack.c.b16 %v3087, %v3086
    %v3206 = vpack.c.b16 %v3089, %v3088
    %v3207 = vpack.c.b16 %v3091, %v3090
    %v3208 = vpack.c.b16 %v3093, %v3092
    %v3209 = vpack.c.b16 %v3095, %v3094
    %v3210 = vpack.c.b16 %v3097, %v3096
    %v3211 = vpack.c.b16 %v3099, %v3098
    %v3212 = vpack.c.b16 %v3101, %v3100
    %v3213 = vpack.c.b16 %v3103, %v3102
    %v3214 = vpack.c.b16 %v3105, %v3104
    %v3215 = vpack.c.b16 %v3107, %v3106
    %v3216 = vpack.c.b16 %v3109, %v3108
    %v3217 = vpack.c.b16 %v3111, %v3110
    %v3218 = vpack.c.b16 %v3113, %v3112
    %v3219 = vpack.c.b16 %v3115, %v3114
    %v3220 = vpack.c.b16 %v3117, %v3116
    %v3221 = vpack.c.b16 %v3119, %v3118
    %v3222 = vpack.c.b16 %v3121, %v3120
    %v3223 = vpack.c.b16 %v3123, %v3122
    %v3224 = vpack.c.b16 %v3125, %v3124
    %v3225 = vpack.c.b16 %v3127, %v3126
    %v3226 = vpack.c.b16 %v3129, %v3128
    %v3227 = vpack.c.b16 %v3131, %v3130
    %v3228 = vpack.c.b16 %v3133, %v3132
    %v3229 = vpack.c.b16 %v3135, %v3134
    %v3230 = vpack.c.b16 %v3137, %v3136
    %v3231 = vpack.c.b16 %v3139, %v3138
    %v3232 = vpack.c.b16 %v3141, %v3140
    %v3233 = vpack.c.b16 %v3143, %v3142
    %v3234 = vpack.c.b16 %v3145, %v3144
    %v3235 = vpack.c.b16 %v3147, %v3146
    %v3236 = vpack.c.b16 %v3149, %v3148
    %v3237 = vpack.c.b16 %v3151, %v3150
    %v3238 = vpack.c.b16 %v3153, %v3152
    %v3239 = vpack.c.b16 %v3155, %v3154
    %v3240 = vpack.c.b16 %v3157, %v3156
    %v3241 = vpack.c.b16 %v3159, %v3158
    %v3242 = vpack.c.b16 %v3161, %v3160
    %v3243 = vpack.c.b16 %v3163, %v3162
    %v3244 = vpack.c.b16 %v3165, %v3164
    %v3245 = vpack.c.b16 %v3167, %v3166
    %v3246 = vpack.c.b16 %v3169, %v3168
    %v3247 = vpack.c.b16 %v3171, %v3170
    %v3248 = vpack.c.b16 %v3173, %v3172
    %v3249 = vpack.c.b16 %v3175, %v3174
    %v3250 = vpack.c.b16 %v3177, %v3176
    %v3251 = vpack.c.b16 %v3179, %v3178
    %v3252 = vpack.c.b16 %v3181, %v3180
    %v3253 = vpack.c.b16 %v3183, %v3182
    %v3254 = vpack.c.b16 %v3185, %v3184
    %v3255 = vpack.c.b16 %v3187, %v3186
    %v3256 = vpack.c.b16 %v3189, %v3188
    %v3257 = vpack.c.b16 %v3191, %v3190
    %v3258 = vpack.c.b16 %v3193, %v3192
    %v3259 = vpack.c.b16 %v3195, %v3194
    %3324 = vmatprep.subr.bf16.mxu0 0
    %3325 = vmatpush1.bf16.msra.mxu0 %v3196
    %3326 = vmatprep.subr.bf16.mxu0 0
    %3327 = vmatpush1.bf16.msra.mxu0 %v3197
    %3328 = vmatprep.subr.bf16.mxu0 0
    %3329 = vmatpush1.bf16.msra.mxu0 %v3198
    %3330 = vmatprep.subr.bf16.mxu0 0
    %3331 = vmatpush1.bf16.msra.mxu0 %v3199
    %3332 = vmatprep.subr.bf16.mxu0 0
    %3333 = vmatpush1.bf16.msra.mxu0 %v3200
    %3334 = vmatprep.subr.bf16.mxu0 0
    %3335 = vmatpush1.bf16.msra.mxu0 %v3201
    %3336 = vmatprep.subr.bf16.mxu0 0
    %3337 = vmatpush1.bf16.msra.mxu0 %v3202
    %3338 = vmatprep.subr.bf16.mxu0 0
    %3339 = vmatpush1.bf16.msra.mxu0 %v3203
    %3340 = vmatprep.subr.bf16.mxu0 0
    %3341 = vmatpush1.bf16.msra.mxu0 %v3204
    %3342 = vmatprep.subr.bf16.mxu0 0
    %3343 = vmatpush1.bf16.msra.mxu0 %v3205
    %3344 = vmatprep.subr.bf16.mxu0 0
    %3345 = vmatpush1.bf16.msra.mxu0 %v3206
    %3346 = vmatprep.subr.bf16.mxu0 0
    %3347 = vmatpush1.bf16.msra.mxu0 %v3207
    %3348 = vmatprep.subr.bf16.mxu0 0
    %3349 = vmatpush1.bf16.msra.mxu0 %v3208
    %3350 = vmatprep.subr.bf16.mxu0 0
    %3351 = vmatpush1.bf16.msra.mxu0 %v3209
    %3352 = vmatprep.subr.bf16.mxu0 0
    %3353 = vmatpush1.bf16.msra.mxu0 %v3210
    %3354 = vmatprep.subr.bf16.mxu0 0
    %3355 = vmatpush1.bf16.msra.mxu0 %v3211
    %3356 = vmatprep.mubr.bf16.mxu0 %v2798
    %3357 = vmatmul.mubr.bf16.gmra.mrb[0].mxu0 %v2797
    %v3358 = vpop.f32.mrb[0].mxu0
    %v3359 = vadd.f32 %v2938, %v3358
    %v3360 = vpop.f32.mrb[0].mxu0
    %v3361 = vpop.f32.mrb[0].mxu0
    %v3362 = vpop.f32.mrb[0].mxu0
    %3363 = vdwg.mxu0
    %3364 = vmatprep.subr.bf16.mxu0 0
    %3365 = vmatpush1.bf16.msra.mxu0 %v3212
    %3366 = vmatprep.subr.bf16.mxu0 0
    %3367 = vmatpush1.bf16.msra.mxu0 %v3213
    %3368 = vmatprep.subr.bf16.mxu0 0
    %3369 = vmatpush1.bf16.msra.mxu0 %v3214
    %3370 = vmatprep.subr.bf16.mxu0 0
    %3371 = vmatpush1.bf16.msra.mxu0 %v3215
    %3372 = vmatprep.subr.bf16.mxu0 0
    %3373 = vmatpush1.bf16.msra.mxu0 %v3216
    %3374 = vmatprep.subr.bf16.mxu0 0
    %3375 = vmatpush1.bf16.msra.mxu0 %v3217
    %3376 = vmatprep.subr.bf16.mxu0 0
    %3377 = vmatpush1.bf16.msra.mxu0 %v3218
    %3378 = vmatprep.subr.bf16.mxu0 0
    %3379 = vmatpush1.bf16.msra.mxu0 %v3219
    %3380 = vmatprep.subr.bf16.mxu0 0
    %3381 = vmatpush1.bf16.msra.mxu0 %v3220
    %3382 = vmatprep.subr.bf16.mxu0 0
    %3383 = vmatpush1.bf16.msra.mxu0 %v3221
    %3384 = vmatprep.subr.bf16.mxu0 0
    %3385 = vmatpush1.bf16.msra.mxu0 %v3222
    %3386 = vmatprep.subr.bf16.mxu0 0
    %3387 = vmatpush1.bf16.msra.mxu0 %v3223
    %3388 = vmatprep.subr.bf16.mxu0 0
    %3389 = vmatpush1.bf16.msra.mxu0 %v3224
    %3390 = vmatprep.subr.bf16.mxu0 0
    %3391 = vmatpush1.bf16.msra.mxu0 %v3225
    %3392 = vmatprep.subr.bf16.mxu0 0
    %3393 = vmatpush1.bf16.msra.mxu0 %v3226
    %3394 = vmatprep.subr.bf16.mxu0 0
    %3395 = vmatpush1.bf16.msra.mxu0 %v3227
    %3396 = vmatprep.mubr.bf16.mxu0 %v2800
    %3397 = vmatmul.mubr.bf16.gmra.mrb[0].mxu0 %v2799
    %v3398 = vpop.f32.mrb[0].mxu0
    %v3399 = vadd.f32 %v3359, %v3398
    %v3400 = vpop.f32.mrb[0].mxu0
    %v3401 = vpop.f32.mrb[0].mxu0
    %v3402 = vpop.f32.mrb[0].mxu0
    %3403 = vdwg.mxu0
    %3404 = vmatprep.subr.bf16.mxu0 0
    %3405 = vmatpush1.bf16.msra.mxu0 %v3228
    %3406 = vmatprep.subr.bf16.mxu0 0
    %3407 = vmatpush1.bf16.msra.mxu0 %v3229
    %3408 = vmatprep.subr.bf16.mxu0 0
    %3409 = vmatpush1.bf16.msra.mxu0 %v3230
    %3410 = vmatprep.subr.bf16.mxu0 0
    %3411 = vmatpush1.bf16.msra.mxu0 %v3231
    %3412 = vmatprep.subr.bf16.mxu0 0
    %3413 = vmatpush1.bf16.msra.mxu0 %v3232
    %3414 = vmatprep.subr.bf16.mxu0 0
    %3415 = vmatpush1.bf16.msra.mxu0 %v3233
    %3416 = vmatprep.subr.bf16.mxu0 0
    %3417 = vmatpush1.bf16.msra.mxu0 %v3234
    %3418 = vmatprep.subr.bf16.mxu0 0
    %3419 = vmatpush1.bf16.msra.mxu0 %v3235
    %3420 = vmatprep.subr.bf16.mxu0 0
    %3421 = vmatpush1.bf16.msra.mxu0 %v3236
    %3422 = vmatprep.subr.bf16.mxu0 0
    %3423 = vmatpush1.bf16.msra.mxu0 %v3237
    %3424 = vmatprep.subr.bf16.mxu0 0
    %3425 = vmatpush1.bf16.msra.mxu0 %v3238
    %3426 = vmatprep.subr.bf16.mxu0 0
    %3427 = vmatpush1.bf16.msra.mxu0 %v3239
    %3428 = vmatprep.subr.bf16.mxu0 0
    %3429 = vmatpush1.bf16.msra.mxu0 %v3240
    %3430 = vmatprep.subr.bf16.mxu0 0
    %3431 = vmatpush1.bf16.msra.mxu0 %v3241
    %3432 = vmatprep.subr.bf16.mxu0 0
    %3433 = vmatpush1.bf16.msra.mxu0 %v3242
    %3434 = vmatprep.subr.bf16.mxu0 0
    %3435 = vmatpush1.bf16.msra.mxu0 %v3243
    %3436 = vmatprep.mubr.bf16.mxu0 %v2802
    %3437 = vmatmul.mubr.bf16.gmra.mrb[0].mxu0 %v2801
    %v3438 = vpop.f32.mrb[0].mxu0
    %v3439 = vadd.f32 %v3399, %v3438
    %v3440 = vpop.f32.mrb[0].mxu0
    %v3441 = vpop.f32.mrb[0].mxu0
    %v3442 = vpop.f32.mrb[0].mxu0
    %3443 = vdwg.mxu0
    %3444 = vmatprep.subr.bf16.mxu0 0
    %3445 = vmatpush1.bf16.msra.mxu0 %v3244
    %3446 = vmatprep.subr.bf16.mxu0 0
    %3447 = vmatpush1.bf16.msra.mxu0 %v3245
    %3448 = vmatprep.subr.bf16.mxu0 0
    %3449 = vmatpush1.bf16.msra.mxu0 %v3246
    %3450 = vmatprep.subr.bf16.mxu0 0
    %3451 = vmatpush1.bf16.msra.mxu0 %v3247
    %3452 = vmatprep.subr.bf16.mxu0 0
    %3453 = vmatpush1.bf16.msra.mxu0 %v3248
    %3454 = vmatprep.subr.bf16.mxu0 0
    %3455 = vmatpush1.bf16.msra.mxu0 %v3249
    %3456 = vmatprep.subr.bf16.mxu0 0
    %3457 = vmatpush1.bf16.msra.mxu0 %v3250
    %3458 = vmatprep.subr.bf16.mxu0 0
    %3459 = vmatpush1.bf16.msra.mxu0 %v3251
    %3460 = vmatprep.subr.bf16.mxu0 0
    %3461 = vmatpush1.bf16.msra.mxu0 %v3252
    %3462 = vmatprep.subr.bf16.mxu0 0
    %3463 = vmatpush1.bf16.msra.mxu0 %v3253
    %3464 = vmatprep.subr.bf16.mxu0 0
    %3465 = vmatpush1.bf16.msra.mxu0 %v3254
    %3466 = vmatprep.subr.bf16.mxu0 0
    %3467 = vmatpush1.bf16.msra.mxu0 %v3255
    %3468 = vmatprep.subr.bf16.mxu0 0
    %3469 = vmatpush1.bf16.msra.mxu0 %v3256
    %3470 = vmatprep.subr.bf16.mxu0 0
    %3471 = vmatpush1.bf16.msra.mxu0 %v3257
    %3472 = vmatprep.subr.bf16.mxu0 0
    %3473 = vmatpush1.bf16.msra.mxu0 %v3258
    %3474 = vmatprep.subr.bf16.mxu0 0
    %3475 = vmatpush1.bf16.msra.mxu0 %v3259
    %3476 = vmatprep.mubr.bf16.mxu0 %v2804
    %3477 = vmatmul.mubr.bf16.gmra.mrb[0].mxu0 %v2803
    %v3478 = vpop.f32.mrb[0].mxu0
    %v3479 = vadd.f32 %v3439, %v3478
    %v3480 = vpop.f32.mrb[0].mxu0
    %v3481 = vpop.f32.mrb[0].mxu0
    %v3482 = vpop.f32.mrb[0].mxu0
    %3483 = vdwg.mxu0
    %3484 = vst [vmem:[#allocation13] sm:$0xff] %v3479
    // Predicated region
    $region70: #{tpu_custom_call.1} parent=1 // pred_check
      _
    $region71: #{tpu_custom_call.1} parent=1 // pred_check_branch
      %3486 = sbr.rel (0) target = $region73
    $region72: #{tpu_custom_call.1} parent=1 // pred_region
      %s3488 = ssub.s32 128, 128
      %3489 = vsyncadd [#allocation4], %s3488
      %s3491 = sshll.u32 [#allocation13], 4
      %s3492 = int_to_ptr.vmem [resolvable:$true] %s3491
      %3494 = dma.vmem_to_hbm [thread:$0]  %s3492, 128, %s11, [#allocation4]
    $region73: #{tpu_custom_call.1} parent=1 // pred_fallthru
      _
    // Predicated region
    $region74: #{tpu_custom_call.1} parent=1 // pred_check
      _
    $region75: #{tpu_custom_call.1} parent=1 // pred_check_branch
      %3496 = sbr.rel (0) target = $region77
    $region76: #{tpu_custom_call.1} parent=1 // pred_region
      %3497 = dma.done [#allocation4], 128
    $region77: #{tpu_custom_call.1} parent=1 // pred_fallthru
      _
    %3498 = vsyncpa [#allocation3], 1
    %3499 = vsyncpa [#allocation6], 1
    %3500 = vsyncpa [#allocation9], 1
    %3501 = vsyncpa [#allocation12], 1
    %3502 = vsyncpa [#allocation4], 1

</llo_original>
